<compile_context>
chip_gen: v6e
topology: v6e:2x2x1
jax: 0.10.0
libtpu: 0.0.40
codegen_flags: <defaults>
</compile_context>

<pallas_src>
import functools

import jax
import jax.numpy as jnp
from jax.experimental import pallas as pl
from jax.experimental.pallas import tpu as pltpu


def _recurrent_block_kernel(x_ref, w_ref, shift_ref, mask_ref, out_ref, *,
                            t, H, W, C):
    """One batch element of the whole recurrent block.

    x_ref:     (Cp, H*W)   input activation (channels-major, lane-dense)
    w_ref:     (Cp, 9*C)   folded weight columns; column (tap*C + ci) holds
                           W[dy,dx,ci,:] * bn_scale (tap = dy*3 + dx)
    shift_ref: (Cp, 1)     folded bias:  bias*scale + (beta - mean*scale)
    mask_ref:  (9, H*W)    0/1 boundary-validity mask per tap
    out_ref:   (Cp, H*W)   output activation
    """
    Cp, P = x_ref.shape

    x2 = x_ref[...]                                   # (Cp, P) f32
    w_all = w_ref[...]                                # (Cp, 9C)
    shift_col = shift_ref[...]                        # (Cp, 1)
    m_all = mask_ref[...]                             # (9, P)

    # Hoist loop-invariant weight columns / masks out of the recurrence
    # (weights and masks do not change across the t+1 conv applications).
    wcols = [w_all[:, k:k + 1] for k in range(9 * C)]          # each (Cp, 1)
    tap_masks = [m_all[tp:tp + 1, :] for tp in range(9)]       # each (1, P)

    def conv_bn_relu(a):
        """a: (Cp, P) -> ReLU(conv3x3(a)*scale + shift), same layout."""
        acc = jnp.zeros((Cp, P), jnp.float32)
        for tap in range(9):
            dy, dx = divmod(tap, 3)
            # Flat-spatial shift of this tap: (dy-1)*W + (dx-1).
            s = (dy - 1) * W + (dx - 1)
            if s == 0:
                shifted = a                           # center tap, no shift
            else:
                # roll(x, k)[p] = x[(p - k) mod P]; we want x[p + s].
                shifted = pltpu.roll(a, shift=(-s) % P, axis=1)
            if not (dy == 1 and dx == 1):
                # Zero out positions whose tap falls outside the image
                # (this also kills the circular-wrap garbage of the roll).
                shifted = shifted * tap_masks[tap]
            # Channel mix as C outer-product FMAs: (Cp,1) x (1,P).
            for ci in range(C):
                acc = acc + wcols[tap * C + ci] * shifted[ci:ci + 1, :]
        # Folded bias+BN shift as a broadcasting column add, then ReLU.
        return jnp.maximum(acc + shift_col, 0.0)

    # PyTorch recurrence:  x1 = f(x); then x1 = f(x + x1)  t times.
    x1 = conv_bn_relu(x2)
    if t <= 3:
        for _ in range(t):                            # small t: keep unrolled
            x1 = conv_bn_relu(x2 + x1)
    else:
        x1 = jax.lax.fori_loop(0, t, lambda i, v: conv_bn_relu(x2 + v), x1)

    out_ref[...] = x1.astype(out_ref.dtype)


def recurrent_block(x_nchw, w_hwio, bias, bn_scale, bn_shift, *, t=2):
    """x_nchw: (N, C, H, W) float32  ->  (N, C, H, W) float32."""
    assert t >= 1, "Recurrent_block requires t >= 1"
    N, C, H, W = x_nchw.shape
    P = H * W
    Cp = ((C + 7) // 8) * 8                           # pad channels to 8 sublanes

    # Channels-major, lane-dense activation slab: (N, Cp, H*W).  NCHW -> this
    # is a pure reshape (no transpose); padded channels are identically zero
    # through the whole recurrence (zero weights, zero shift), see below.
    x = x_nchw.reshape(N, C, P).astype(jnp.float32)
    if Cp != C:
        x = jnp.pad(x, ((0, 0), (0, Cp - C), (0, 0)))

    # Fold conv bias + inference-mode BN into the weights on the host:
    #   relu((conv(x,w)+b)*s + sh)  ==  relu(conv(x, w*s) + (b*s + sh))
    wf = w_hwio.astype(jnp.float32) * bn_scale.astype(jnp.float32).reshape(1, 1, 1, C)
    # w_cols[co, tap*C + ci] = wf[dy, dx, ci, co]   (tap = dy*3 + dx)
    w_cols = wf.reshape(9, C, C).transpose(2, 0, 1).reshape(C, 9 * C)
    shift_col = (bias.astype(jnp.float32) * bn_scale.astype(jnp.float32)
                 + bn_shift.astype(jnp.float32)).reshape(C, 1)
    if Cp != C:
        w_cols = jnp.pad(w_cols, ((0, Cp - C), (0, 0)))
        shift_col = jnp.pad(shift_col, ((0, Cp - C), (0, 0)))

    # Host-precomputed 0/1 validity masks, one per 3x3 tap, over the flat
    # spatial index p = h*W + w.
    p = jnp.arange(P)
    hh, ww = p // W, p % W
    mask_rows = []
    for dy in range(3):
        for dx in range(3):
            valid = ((hh + dy - 1 >= 0) & (hh + dy - 1 < H) &
                     (ww + dx - 1 >= 0) & (ww + dx - 1 < W))
            mask_rows.append(valid.astype(jnp.float32))
    masks = jnp.stack(mask_rows, axis=0)              # (9, P)

    out = pl.pallas_call(
        functools.partial(_recurrent_block_kernel, t=t, H=H, W=W, C=C),
        out_shape=jax.ShapeDtypeStruct((N, Cp, P), jnp.float32),
        grid=(N,),
        in_specs=[
            pl.BlockSpec((None, Cp, P), lambda n: (n, 0, 0)),   # activations
            pl.BlockSpec((Cp, 9 * C), lambda n: (0, 0)),        # weight cols
            pl.BlockSpec((Cp, 1), lambda n: (0, 0)),            # shift col
            pl.BlockSpec((9, P), lambda n: (0, 0)),             # tap masks
        ],
        out_specs=pl.BlockSpec((None, Cp, P), lambda n: (n, 0, 0)),
        compiler_params=pltpu.CompilerParams(
            dimension_semantics=("parallel",)),
    )(x, w_cols, shift_col, masks)

    return out[:, :C, :].reshape(N, C, H, W)


def _reference(x_nchw, w_hwio, bias, bn_scale, bn_shift, *, t=2):
    """Pure-JAX reference (XLA conv) with identical semantics."""
    x = jnp.transpose(x_nchw, (0, 2, 3, 1)).astype(jnp.float32)

    def f(inp):
        y = jax.lax.conv_general_dilated(
            inp, w_hwio.astype(jnp.float32), window_strides=(1, 1),
            padding="SAME", dimension_numbers=("NHWC", "HWIO", "NHWC"))
        y = (y + bias) * bn_scale + bn_shift
        return jnp.maximum(y, 0.0)

    x1 = None
    for i in range(t):
        if i == 0:
            x1 = f(x)
        x1 = f(x + x1)
    return jnp.transpose(x1, (0, 3, 1, 2))


if __name__ == "__main__":
    # Small shapes consistent with the module: batch=2, ch_out=4, 16x16 spatial.
    N, C, H, W = 2, 4, 16, 16
    t = 2

    key = jax.random.PRNGKey(0)
    kx, kw, kb, kg, kbe, km, kv = jax.random.split(key, 7)

    x = jax.random.normal(kx, (N, C, H, W), dtype=jnp.float32)

    # Conv2d(ch_out, ch_out, 3) weight in HWIO layout, plus bias.
    w_hwio = 0.2 * jax.random.normal(kw, (3, 3, C, C), dtype=jnp.float32)
    bias = 0.1 * jax.random.normal(kb, (C,), dtype=jnp.float32)

    # BatchNorm2d(ch_out) parameters (inference mode), folded into scale/shift.
    eps = 1e-5
    gamma = 1.0 + 0.1 * jax.random.normal(kg, (C,), dtype=jnp.float32)
    beta = 0.1 * jax.random.normal(kbe, (C,), dtype=jnp.float32)
    running_mean = 0.1 * jax.random.normal(km, (C,), dtype=jnp.float32)
    running_var = 1.0 + 0.1 * jax.random.uniform(kv, (C,), dtype=jnp.float32)
    bn_scale = gamma / jnp.sqrt(running_var + eps)
    bn_shift = beta - running_mean * bn_scale

    out = recurrent_block(x, w_hwio, bias, bn_scale, bn_shift, t=t)
    out = jax.block_until_ready(out)

    ref = _reference(x, w_hwio, bias, bn_scale, bn_shift, t=t)
    assert out.shape == (N, C, H, W)
    assert jnp.allclose(out, ref, atol=1e-4, rtol=1e-4), "mismatch vs reference"

    print("KERNEL_OK")
</pallas_src>

<mosaic_0001>
module attributes {stable_mosaic.version = 11 : i64} {
  func.func @_recurrent_block_kernel(%arg0: i32, %arg1: memref<1x8x256xf32, #tpu.memory_space<vmem>>, %arg2: memref<8x36xf32, #tpu.memory_space<vmem>>, %arg3: memref<8x1xf32, #tpu.memory_space<vmem>>, %arg4: memref<9x256xf32, #tpu.memory_space<vmem>>, %arg5: memref<1x8x256xf32, #tpu.memory_space<vmem>>) attributes {dimension_semantics = [#tpu.dimension_semantics<parallel>], iteration_bounds = array<i64: 2>, scalar_prefetch = 0 : i64, scratch_operands = 0 : i64, tpu.core_type = #tpu.core_type<tc>, window_params = [{transform_indices = @transform_0, window_bounds = array<i64: 1, 8, 256>}, {pipeline_mode = #tpu.pipeline_mode<synchronous>, transform_indices = @transform_1, window_bounds = array<i64: 8, 36>}, {pipeline_mode = #tpu.pipeline_mode<synchronous>, transform_indices = @transform_2, window_bounds = array<i64: 8, 1>}, {pipeline_mode = #tpu.pipeline_mode<synchronous>, transform_indices = @transform_3, window_bounds = array<i64: 9, 256>}, {transform_indices = @transform_4, window_bounds = array<i64: 1, 8, 256>}]} {
    %c0 = arith.constant 0 : index
    %c0_0 = arith.constant 0 : index
    %c0_1 = arith.constant 0 : index
    %0 = vector.load %arg1[%c0, %c0_0, %c0_1] : memref<1x8x256xf32, #tpu.memory_space<vmem>>, vector<1x8x256xf32>
    %1 = vector.shape_cast %0 : vector<1x8x256xf32> to vector<8x256xf32>
    %c0_2 = arith.constant 0 : index
    %c0_3 = arith.constant 0 : index
    %2 = vector.load %arg2[%c0_2, %c0_3] : memref<8x36xf32, #tpu.memory_space<vmem>>, vector<8x36xf32>
    %c0_4 = arith.constant 0 : index
    %c0_5 = arith.constant 0 : index
    %3 = vector.load %arg3[%c0_4, %c0_5] : memref<8x1xf32, #tpu.memory_space<vmem>>, vector<8x1xf32>
    %c0_6 = arith.constant 0 : index
    %c0_7 = arith.constant 0 : index
    %4 = vector.load %arg4[%c0_6, %c0_7] : memref<9x256xf32, #tpu.memory_space<vmem>>, vector<9x256xf32>
    %5 = vector.extract_strided_slice %2 {offsets = [0, 0], sizes = [8, 1], strides = [1, 1]} : vector<8x36xf32> to vector<8x1xf32>
    %6 = vector.extract_strided_slice %2 {offsets = [0, 1], sizes = [8, 1], strides = [1, 1]} : vector<8x36xf32> to vector<8x1xf32>
    %7 = vector.extract_strided_slice %2 {offsets = [0, 2], sizes = [8, 1], strides = [1, 1]} : vector<8x36xf32> to vector<8x1xf32>
    %8 = vector.extract_strided_slice %2 {offsets = [0, 3], sizes = [8, 1], strides = [1, 1]} : vector<8x36xf32> to vector<8x1xf32>
    %9 = vector.extract_strided_slice %2 {offsets = [0, 4], sizes = [8, 1], strides = [1, 1]} : vector<8x36xf32> to vector<8x1xf32>
    %10 = vector.extract_strided_slice %2 {offsets = [0, 5], sizes = [8, 1], strides = [1, 1]} : vector<8x36xf32> to vector<8x1xf32>
    %11 = vector.extract_strided_slice %2 {offsets = [0, 6], sizes = [8, 1], strides = [1, 1]} : vector<8x36xf32> to vector<8x1xf32>
    %12 = vector.extract_strided_slice %2 {offsets = [0, 7], sizes = [8, 1], strides = [1, 1]} : vector<8x36xf32> to vector<8x1xf32>
    %13 = vector.extract_strided_slice %2 {offsets = [0, 8], sizes = [8, 1], strides = [1, 1]} : vector<8x36xf32> to vector<8x1xf32>
    %14 = vector.extract_strided_slice %2 {offsets = [0, 9], sizes = [8, 1], strides = [1, 1]} : vector<8x36xf32> to vector<8x1xf32>
    %15 = vector.extract_strided_slice %2 {offsets = [0, 10], sizes = [8, 1], strides = [1, 1]} : vector<8x36xf32> to vector<8x1xf32>
    %16 = vector.extract_strided_slice %2 {offsets = [0, 11], sizes = [8, 1], strides = [1, 1]} : vector<8x36xf32> to vector<8x1xf32>
    %17 = vector.extract_strided_slice %2 {offsets = [0, 12], sizes = [8, 1], strides = [1, 1]} : vector<8x36xf32> to vector<8x1xf32>
    %18 = vector.extract_strided_slice %2 {offsets = [0, 13], sizes = [8, 1], strides = [1, 1]} : vector<8x36xf32> to vector<8x1xf32>
    %19 = vector.extract_strided_slice %2 {offsets = [0, 14], sizes = [8, 1], strides = [1, 1]} : vector<8x36xf32> to vector<8x1xf32>
    %20 = vector.extract_strided_slice %2 {offsets = [0, 15], sizes = [8, 1], strides = [1, 1]} : vector<8x36xf32> to vector<8x1xf32>
    %21 = vector.extract_strided_slice %2 {offsets = [0, 16], sizes = [8, 1], strides = [1, 1]} : vector<8x36xf32> to vector<8x1xf32>
    %22 = vector.extract_strided_slice %2 {offsets = [0, 17], sizes = [8, 1], strides = [1, 1]} : vector<8x36xf32> to vector<8x1xf32>
    %23 = vector.extract_strided_slice %2 {offsets = [0, 18], sizes = [8, 1], strides = [1, 1]} : vector<8x36xf32> to vector<8x1xf32>
    %24 = vector.extract_strided_slice %2 {offsets = [0, 19], sizes = [8, 1], strides = [1, 1]} : vector<8x36xf32> to vector<8x1xf32>
    %25 = vector.extract_strided_slice %2 {offsets = [0, 20], sizes = [8, 1], strides = [1, 1]} : vector<8x36xf32> to vector<8x1xf32>
    %26 = vector.extract_strided_slice %2 {offsets = [0, 21], sizes = [8, 1], strides = [1, 1]} : vector<8x36xf32> to vector<8x1xf32>
    %27 = vector.extract_strided_slice %2 {offsets = [0, 22], sizes = [8, 1], strides = [1, 1]} : vector<8x36xf32> to vector<8x1xf32>
    %28 = vector.extract_strided_slice %2 {offsets = [0, 23], sizes = [8, 1], strides = [1, 1]} : vector<8x36xf32> to vector<8x1xf32>
    %29 = vector.extract_strided_slice %2 {offsets = [0, 24], sizes = [8, 1], strides = [1, 1]} : vector<8x36xf32> to vector<8x1xf32>
    %30 = vector.extract_strided_slice %2 {offsets = [0, 25], sizes = [8, 1], strides = [1, 1]} : vector<8x36xf32> to vector<8x1xf32>
    %31 = vector.extract_strided_slice %2 {offsets = [0, 26], sizes = [8, 1], strides = [1, 1]} : vector<8x36xf32> to vector<8x1xf32>
    %32 = vector.extract_strided_slice %2 {offsets = [0, 27], sizes = [8, 1], strides = [1, 1]} : vector<8x36xf32> to vector<8x1xf32>
    %33 = vector.extract_strided_slice %2 {offsets = [0, 28], sizes = [8, 1], strides = [1, 1]} : vector<8x36xf32> to vector<8x1xf32>
    %34 = vector.extract_strided_slice %2 {offsets = [0, 29], sizes = [8, 1], strides = [1, 1]} : vector<8x36xf32> to vector<8x1xf32>
    %35 = vector.extract_strided_slice %2 {offsets = [0, 30], sizes = [8, 1], strides = [1, 1]} : vector<8x36xf32> to vector<8x1xf32>
    %36 = vector.extract_strided_slice %2 {offsets = [0, 31], sizes = [8, 1], strides = [1, 1]} : vector<8x36xf32> to vector<8x1xf32>
    %37 = vector.extract_strided_slice %2 {offsets = [0, 32], sizes = [8, 1], strides = [1, 1]} : vector<8x36xf32> to vector<8x1xf32>
    %38 = vector.extract_strided_slice %2 {offsets = [0, 33], sizes = [8, 1], strides = [1, 1]} : vector<8x36xf32> to vector<8x1xf32>
    %39 = vector.extract_strided_slice %2 {offsets = [0, 34], sizes = [8, 1], strides = [1, 1]} : vector<8x36xf32> to vector<8x1xf32>
    %40 = vector.extract_strided_slice %2 {offsets = [0, 35], sizes = [8, 1], strides = [1, 1]} : vector<8x36xf32> to vector<8x1xf32>
    %41 = vector.extract_strided_slice %4 {offsets = [0, 0], sizes = [1, 256], strides = [1, 1]} : vector<9x256xf32> to vector<1x256xf32>
    %42 = vector.extract_strided_slice %4 {offsets = [1, 0], sizes = [1, 256], strides = [1, 1]} : vector<9x256xf32> to vector<1x256xf32>
    %43 = vector.extract_strided_slice %4 {offsets = [2, 0], sizes = [1, 256], strides = [1, 1]} : vector<9x256xf32> to vector<1x256xf32>
    %44 = vector.extract_strided_slice %4 {offsets = [3, 0], sizes = [1, 256], strides = [1, 1]} : vector<9x256xf32> to vector<1x256xf32>
    %45 = vector.extract_strided_slice %4 {offsets = [5, 0], sizes = [1, 256], strides = [1, 1]} : vector<9x256xf32> to vector<1x256xf32>
    %46 = vector.extract_strided_slice %4 {offsets = [6, 0], sizes = [1, 256], strides = [1, 1]} : vector<9x256xf32> to vector<1x256xf32>
    %47 = vector.extract_strided_slice %4 {offsets = [7, 0], sizes = [1, 256], strides = [1, 1]} : vector<9x256xf32> to vector<1x256xf32>
    %48 = vector.extract_strided_slice %4 {offsets = [8, 0], sizes = [1, 256], strides = [1, 1]} : vector<9x256xf32> to vector<1x256xf32>
    %cst = arith.constant 0.000000e+00 : f32
    %49 = vector.broadcast %cst : f32 to vector<8x256xf32>
    %c17_i32 = arith.constant 17 : i32
    %50 = tpu.dynamic_rotate %1 by %c17_i32 dim 1 : vector<8x256xf32>, i32 -> vector<8x256xf32>
    %51 = vector.broadcast %41 : vector<1x256xf32> to vector<8x256xf32>
    %52 = arith.mulf %50, %51 : vector<8x256xf32>
    %53 = vector.extract_strided_slice %52 {offsets = [0, 0], sizes = [1, 256], strides = [1, 1]} : vector<8x256xf32> to vector<1x256xf32>
    %54 = vector.broadcast %5 : vector<8x1xf32> to vector<8x256xf32>
    %55 = vector.broadcast %53 : vector<1x256xf32> to vector<8x256xf32>
    %56 = arith.mulf %54, %55 : vector<8x256xf32>
    %57 = arith.addf %49, %56 : vector<8x256xf32>
    %58 = vector.extract_strided_slice %52 {offsets = [1, 0], sizes = [1, 256], strides = [1, 1]} : vector<8x256xf32> to vector<1x256xf32>
    %59 = vector.broadcast %6 : vector<8x1xf32> to vector<8x256xf32>
    %60 = vector.broadcast %58 : vector<1x256xf32> to vector<8x256xf32>
    %61 = arith.mulf %59, %60 : vector<8x256xf32>
    %62 = arith.addf %57, %61 : vector<8x256xf32>
    %63 = vector.extract_strided_slice %52 {offsets = [2, 0], sizes = [1, 256], strides = [1, 1]} : vector<8x256xf32> to vector<1x256xf32>
    %64 = vector.broadcast %7 : vector<8x1xf32> to vector<8x256xf32>
    %65 = vector.broadcast %63 : vector<1x256xf32> to vector<8x256xf32>
    %66 = arith.mulf %64, %65 : vector<8x256xf32>
    %67 = arith.addf %62, %66 : vector<8x256xf32>
    %68 = vector.extract_strided_slice %52 {offsets = [3, 0], sizes = [1, 256], strides = [1, 1]} : vector<8x256xf32> to vector<1x256xf32>
    %69 = vector.broadcast %8 : vector<8x1xf32> to vector<8x256xf32>
    %70 = vector.broadcast %68 : vector<1x256xf32> to vector<8x256xf32>
    %71 = arith.mulf %69, %70 : vector<8x256xf32>
    %72 = arith.addf %67, %71 : vector<8x256xf32>
    %c16_i32 = arith.constant 16 : i32
    %73 = tpu.dynamic_rotate %1 by %c16_i32 dim 1 : vector<8x256xf32>, i32 -> vector<8x256xf32>
    %74 = vector.broadcast %42 : vector<1x256xf32> to vector<8x256xf32>
    %75 = arith.mulf %73, %74 : vector<8x256xf32>
    %76 = vector.extract_strided_slice %75 {offsets = [0, 0], sizes = [1, 256], strides = [1, 1]} : vector<8x256xf32> to vector<1x256xf32>
    %77 = vector.broadcast %9 : vector<8x1xf32> to vector<8x256xf32>
    %78 = vector.broadcast %76 : vector<1x256xf32> to vector<8x256xf32>
    %79 = arith.mulf %77, %78 : vector<8x256xf32>
    %80 = arith.addf %72, %79 : vector<8x256xf32>
    %81 = vector.extract_strided_slice %75 {offsets = [1, 0], sizes = [1, 256], strides = [1, 1]} : vector<8x256xf32> to vector<1x256xf32>
    %82 = vector.broadcast %10 : vector<8x1xf32> to vector<8x256xf32>
    %83 = vector.broadcast %81 : vector<1x256xf32> to vector<8x256xf32>
    %84 = arith.mulf %82, %83 : vector<8x256xf32>
    %85 = arith.addf %80, %84 : vector<8x256xf32>
    %86 = vector.extract_strided_slice %75 {offsets = [2, 0], sizes = [1, 256], strides = [1, 1]} : vector<8x256xf32> to vector<1x256xf32>
    %87 = vector.broadcast %11 : vector<8x1xf32> to vector<8x256xf32>
    %88 = vector.broadcast %86 : vector<1x256xf32> to vector<8x256xf32>
    %89 = arith.mulf %87, %88 : vector<8x256xf32>
    %90 = arith.addf %85, %89 : vector<8x256xf32>
    %91 = vector.extract_strided_slice %75 {offsets = [3, 0], sizes = [1, 256], strides = [1, 1]} : vector<8x256xf32> to vector<1x256xf32>
    %92 = vector.broadcast %12 : vector<8x1xf32> to vector<8x256xf32>
    %93 = vector.broadcast %91 : vector<1x256xf32> to vector<8x256xf32>
    %94 = arith.mulf %92, %93 : vector<8x256xf32>
    %95 = arith.addf %90, %94 : vector<8x256xf32>
    %c15_i32 = arith.constant 15 : i32
    %96 = tpu.dynamic_rotate %1 by %c15_i32 dim 1 : vector<8x256xf32>, i32 -> vector<8x256xf32>
    %97 = vector.broadcast %43 : vector<1x256xf32> to vector<8x256xf32>
    %98 = arith.mulf %96, %97 : vector<8x256xf32>
    %99 = vector.extract_strided_slice %98 {offsets = [0, 0], sizes = [1, 256], strides = [1, 1]} : vector<8x256xf32> to vector<1x256xf32>
    %100 = vector.broadcast %13 : vector<8x1xf32> to vector<8x256xf32>
    %101 = vector.broadcast %99 : vector<1x256xf32> to vector<8x256xf32>
    %102 = arith.mulf %100, %101 : vector<8x256xf32>
    %103 = arith.addf %95, %102 : vector<8x256xf32>
    %104 = vector.extract_strided_slice %98 {offsets = [1, 0], sizes = [1, 256], strides = [1, 1]} : vector<8x256xf32> to vector<1x256xf32>
    %105 = vector.broadcast %14 : vector<8x1xf32> to vector<8x256xf32>
    %106 = vector.broadcast %104 : vector<1x256xf32> to vector<8x256xf32>
    %107 = arith.mulf %105, %106 : vector<8x256xf32>
    %108 = arith.addf %103, %107 : vector<8x256xf32>
    %109 = vector.extract_strided_slice %98 {offsets = [2, 0], sizes = [1, 256], strides = [1, 1]} : vector<8x256xf32> to vector<1x256xf32>
    %110 = vector.broadcast %15 : vector<8x1xf32> to vector<8x256xf32>
    %111 = vector.broadcast %109 : vector<1x256xf32> to vector<8x256xf32>
    %112 = arith.mulf %110, %111 : vector<8x256xf32>
    %113 = arith.addf %108, %112 : vector<8x256xf32>
    %114 = vector.extract_strided_slice %98 {offsets = [3, 0], sizes = [1, 256], strides = [1, 1]} : vector<8x256xf32> to vector<1x256xf32>
    %115 = vector.broadcast %16 : vector<8x1xf32> to vector<8x256xf32>
    %116 = vector.broadcast %114 : vector<1x256xf32> to vector<8x256xf32>
    %117 = arith.mulf %115, %116 : vector<8x256xf32>
    %118 = arith.addf %113, %117 : vector<8x256xf32>
    %c1_i32 = arith.constant 1 : i32
    %119 = tpu.dynamic_rotate %1 by %c1_i32 dim 1 : vector<8x256xf32>, i32 -> vector<8x256xf32>
    %120 = vector.broadcast %44 : vector<1x256xf32> to vector<8x256xf32>
    %121 = arith.mulf %119, %120 : vector<8x256xf32>
    %122 = vector.extract_strided_slice %121 {offsets = [0, 0], sizes = [1, 256], strides = [1, 1]} : vector<8x256xf32> to vector<1x256xf32>
    %123 = vector.broadcast %17 : vector<8x1xf32> to vector<8x256xf32>
    %124 = vector.broadcast %122 : vector<1x256xf32> to vector<8x256xf32>
    %125 = arith.mulf %123, %124 : vector<8x256xf32>
    %126 = arith.addf %118, %125 : vector<8x256xf32>
    %127 = vector.extract_strided_slice %121 {offsets = [1, 0], sizes = [1, 256], strides = [1, 1]} : vector<8x256xf32> to vector<1x256xf32>
    %128 = vector.broadcast %18 : vector<8x1xf32> to vector<8x256xf32>
    %129 = vector.broadcast %127 : vector<1x256xf32> to vector<8x256xf32>
    %130 = arith.mulf %128, %129 : vector<8x256xf32>
    %131 = arith.addf %126, %130 : vector<8x256xf32>
    %132 = vector.extract_strided_slice %121 {offsets = [2, 0], sizes = [1, 256], strides = [1, 1]} : vector<8x256xf32> to vector<1x256xf32>
    %133 = vector.broadcast %19 : vector<8x1xf32> to vector<8x256xf32>
    %134 = vector.broadcast %132 : vector<1x256xf32> to vector<8x256xf32>
    %135 = arith.mulf %133, %134 : vector<8x256xf32>
    %136 = arith.addf %131, %135 : vector<8x256xf32>
    %137 = vector.extract_strided_slice %121 {offsets = [3, 0], sizes = [1, 256], strides = [1, 1]} : vector<8x256xf32> to vector<1x256xf32>
    %138 = vector.broadcast %20 : vector<8x1xf32> to vector<8x256xf32>
    %139 = vector.broadcast %137 : vector<1x256xf32> to vector<8x256xf32>
    %140 = arith.mulf %138, %139 : vector<8x256xf32>
    %141 = arith.addf %136, %140 : vector<8x256xf32>
    %142 = vector.extract_strided_slice %1 {offsets = [0, 0], sizes = [1, 256], strides = [1, 1]} : vector<8x256xf32> to vector<1x256xf32>
    %143 = vector.broadcast %21 : vector<8x1xf32> to vector<8x256xf32>
    %144 = vector.broadcast %142 : vector<1x256xf32> to vector<8x256xf32>
    %145 = arith.mulf %143, %144 : vector<8x256xf32>
    %146 = arith.addf %141, %145 : vector<8x256xf32>
    %147 = vector.extract_strided_slice %1 {offsets = [1, 0], sizes = [1, 256], strides = [1, 1]} : vector<8x256xf32> to vector<1x256xf32>
    %148 = vector.broadcast %22 : vector<8x1xf32> to vector<8x256xf32>
    %149 = vector.broadcast %147 : vector<1x256xf32> to vector<8x256xf32>
    %150 = arith.mulf %148, %149 : vector<8x256xf32>
    %151 = arith.addf %146, %150 : vector<8x256xf32>
    %152 = vector.extract_strided_slice %1 {offsets = [2, 0], sizes = [1, 256], strides = [1, 1]} : vector<8x256xf32> to vector<1x256xf32>
    %153 = vector.broadcast %23 : vector<8x1xf32> to vector<8x256xf32>
    %154 = vector.broadcast %152 : vector<1x256xf32> to vector<8x256xf32>
    %155 = arith.mulf %153, %154 : vector<8x256xf32>
    %156 = arith.addf %151, %155 : vector<8x256xf32>
    %157 = vector.extract_strided_slice %1 {offsets = [3, 0], sizes = [1, 256], strides = [1, 1]} : vector<8x256xf32> to vector<1x256xf32>
    %158 = vector.broadcast %24 : vector<8x1xf32> to vector<8x256xf32>
    %159 = vector.broadcast %157 : vector<1x256xf32> to vector<8x256xf32>
    %160 = arith.mulf %158, %159 : vector<8x256xf32>
    %161 = arith.addf %156, %160 : vector<8x256xf32>
    %c255_i32 = arith.constant 255 : i32
    %162 = tpu.dynamic_rotate %1 by %c255_i32 dim 1 : vector<8x256xf32>, i32 -> vector<8x256xf32>
    %163 = vector.broadcast %45 : vector<1x256xf32> to vector<8x256xf32>
    %164 = arith.mulf %162, %163 : vector<8x256xf32>
    %165 = vector.extract_strided_slice %164 {offsets = [0, 0], sizes = [1, 256], strides = [1, 1]} : vector<8x256xf32> to vector<1x256xf32>
    %166 = vector.broadcast %25 : vector<8x1xf32> to vector<8x256xf32>
    %167 = vector.broadcast %165 : vector<1x256xf32> to vector<8x256xf32>
    %168 = arith.mulf %166, %167 : vector<8x256xf32>
    %169 = arith.addf %161, %168 : vector<8x256xf32>
    %170 = vector.extract_strided_slice %164 {offsets = [1, 0], sizes = [1, 256], strides = [1, 1]} : vector<8x256xf32> to vector<1x256xf32>
    %171 = vector.broadcast %26 : vector<8x1xf32> to vector<8x256xf32>
    %172 = vector.broadcast %170 : vector<1x256xf32> to vector<8x256xf32>
    %173 = arith.mulf %171, %172 : vector<8x256xf32>
    %174 = arith.addf %169, %173 : vector<8x256xf32>
    %175 = vector.extract_strided_slice %164 {offsets = [2, 0], sizes = [1, 256], strides = [1, 1]} : vector<8x256xf32> to vector<1x256xf32>
    %176 = vector.broadcast %27 : vector<8x1xf32> to vector<8x256xf32>
    %177 = vector.broadcast %175 : vector<1x256xf32> to vector<8x256xf32>
    %178 = arith.mulf %176, %177 : vector<8x256xf32>
    %179 = arith.addf %174, %178 : vector<8x256xf32>
    %180 = vector.extract_strided_slice %164 {offsets = [3, 0], sizes = [1, 256], strides = [1, 1]} : vector<8x256xf32> to vector<1x256xf32>
    %181 = vector.broadcast %28 : vector<8x1xf32> to vector<8x256xf32>
    %182 = vector.broadcast %180 : vector<1x256xf32> to vector<8x256xf32>
    %183 = arith.mulf %181, %182 : vector<8x256xf32>
    %184 = arith.addf %179, %183 : vector<8x256xf32>
    %c241_i32 = arith.constant 241 : i32
    %185 = tpu.dynamic_rotate %1 by %c241_i32 dim 1 : vector<8x256xf32>, i32 -> vector<8x256xf32>
    %186 = vector.broadcast %46 : vector<1x256xf32> to vector<8x256xf32>
    %187 = arith.mulf %185, %186 : vector<8x256xf32>
    %188 = vector.extract_strided_slice %187 {offsets = [0, 0], sizes = [1, 256], strides = [1, 1]} : vector<8x256xf32> to vector<1x256xf32>
    %189 = vector.broadcast %29 : vector<8x1xf32> to vector<8x256xf32>
    %190 = vector.broadcast %188 : vector<1x256xf32> to vector<8x256xf32>
    %191 = arith.mulf %189, %190 : vector<8x256xf32>
    %192 = arith.addf %184, %191 : vector<8x256xf32>
    %193 = vector.extract_strided_slice %187 {offsets = [1, 0], sizes = [1, 256], strides = [1, 1]} : vector<8x256xf32> to vector<1x256xf32>
    %194 = vector.broadcast %30 : vector<8x1xf32> to vector<8x256xf32>
    %195 = vector.broadcast %193 : vector<1x256xf32> to vector<8x256xf32>
    %196 = arith.mulf %194, %195 : vector<8x256xf32>
    %197 = arith.addf %192, %196 : vector<8x256xf32>
    %198 = vector.extract_strided_slice %187 {offsets = [2, 0], sizes = [1, 256], strides = [1, 1]} : vector<8x256xf32> to vector<1x256xf32>
    %199 = vector.broadcast %31 : vector<8x1xf32> to vector<8x256xf32>
    %200 = vector.broadcast %198 : vector<1x256xf32> to vector<8x256xf32>
    %201 = arith.mulf %199, %200 : vector<8x256xf32>
    %202 = arith.addf %197, %201 : vector<8x256xf32>
    %203 = vector.extract_strided_slice %187 {offsets = [3, 0], sizes = [1, 256], strides = [1, 1]} : vector<8x256xf32> to vector<1x256xf32>
    %204 = vector.broadcast %32 : vector<8x1xf32> to vector<8x256xf32>
    %205 = vector.broadcast %203 : vector<1x256xf32> to vector<8x256xf32>
    %206 = arith.mulf %204, %205 : vector<8x256xf32>
    %207 = arith.addf %202, %206 : vector<8x256xf32>
    %c240_i32 = arith.constant 240 : i32
    %208 = tpu.dynamic_rotate %1 by %c240_i32 dim 1 : vector<8x256xf32>, i32 -> vector<8x256xf32>
    %209 = vector.broadcast %47 : vector<1x256xf32> to vector<8x256xf32>
    %210 = arith.mulf %208, %209 : vector<8x256xf32>
    %211 = vector.extract_strided_slice %210 {offsets = [0, 0], sizes = [1, 256], strides = [1, 1]} : vector<8x256xf32> to vector<1x256xf32>
    %212 = vector.broadcast %33 : vector<8x1xf32> to vector<8x256xf32>
    %213 = vector.broadcast %211 : vector<1x256xf32> to vector<8x256xf32>
    %214 = arith.mulf %212, %213 : vector<8x256xf32>
    %215 = arith.addf %207, %214 : vector<8x256xf32>
    %216 = vector.extract_strided_slice %210 {offsets = [1, 0], sizes = [1, 256], strides = [1, 1]} : vector<8x256xf32> to vector<1x256xf32>
    %217 = vector.broadcast %34 : vector<8x1xf32> to vector<8x256xf32>
    %218 = vector.broadcast %216 : vector<1x256xf32> to vector<8x256xf32>
    %219 = arith.mulf %217, %218 : vector<8x256xf32>
    %220 = arith.addf %215, %219 : vector<8x256xf32>
    %221 = vector.extract_strided_slice %210 {offsets = [2, 0], sizes = [1, 256], strides = [1, 1]} : vector<8x256xf32> to vector<1x256xf32>
    %222 = vector.broadcast %35 : vector<8x1xf32> to vector<8x256xf32>
    %223 = vector.broadcast %221 : vector<1x256xf32> to vector<8x256xf32>
    %224 = arith.mulf %222, %223 : vector<8x256xf32>
    %225 = arith.addf %220, %224 : vector<8x256xf32>
    %226 = vector.extract_strided_slice %210 {offsets = [3, 0], sizes = [1, 256], strides = [1, 1]} : vector<8x256xf32> to vector<1x256xf32>
    %227 = vector.broadcast %36 : vector<8x1xf32> to vector<8x256xf32>
    %228 = vector.broadcast %226 : vector<1x256xf32> to vector<8x256xf32>
    %229 = arith.mulf %227, %228 : vector<8x256xf32>
    %230 = arith.addf %225, %229 : vector<8x256xf32>
    %c239_i32 = arith.constant 239 : i32
    %231 = tpu.dynamic_rotate %1 by %c239_i32 dim 1 : vector<8x256xf32>, i32 -> vector<8x256xf32>
    %232 = vector.broadcast %48 : vector<1x256xf32> to vector<8x256xf32>
    %233 = arith.mulf %231, %232 : vector<8x256xf32>
    %234 = vector.extract_strided_slice %233 {offsets = [0, 0], sizes = [1, 256], strides = [1, 1]} : vector<8x256xf32> to vector<1x256xf32>
    %235 = vector.broadcast %37 : vector<8x1xf32> to vector<8x256xf32>
    %236 = vector.broadcast %234 : vector<1x256xf32> to vector<8x256xf32>
    %237 = arith.mulf %235, %236 : vector<8x256xf32>
    %238 = arith.addf %230, %237 : vector<8x256xf32>
    %239 = vector.extract_strided_slice %233 {offsets = [1, 0], sizes = [1, 256], strides = [1, 1]} : vector<8x256xf32> to vector<1x256xf32>
    %240 = vector.broadcast %38 : vector<8x1xf32> to vector<8x256xf32>
    %241 = vector.broadcast %239 : vector<1x256xf32> to vector<8x256xf32>
    %242 = arith.mulf %240, %241 : vector<8x256xf32>
    %243 = arith.addf %238, %242 : vector<8x256xf32>
    %244 = vector.extract_strided_slice %233 {offsets = [2, 0], sizes = [1, 256], strides = [1, 1]} : vector<8x256xf32> to vector<1x256xf32>
    %245 = vector.broadcast %39 : vector<8x1xf32> to vector<8x256xf32>
    %246 = vector.broadcast %244 : vector<1x256xf32> to vector<8x256xf32>
    %247 = arith.mulf %245, %246 : vector<8x256xf32>
    %248 = arith.addf %243, %247 : vector<8x256xf32>
    %249 = vector.extract_strided_slice %233 {offsets = [3, 0], sizes = [1, 256], strides = [1, 1]} : vector<8x256xf32> to vector<1x256xf32>
    %250 = vector.broadcast %40 : vector<8x1xf32> to vector<8x256xf32>
    %251 = vector.broadcast %249 : vector<1x256xf32> to vector<8x256xf32>
    %252 = arith.mulf %250, %251 : vector<8x256xf32>
    %253 = arith.addf %248, %252 : vector<8x256xf32>
    %254 = vector.broadcast %3 : vector<8x1xf32> to vector<8x256xf32>
    %255 = arith.addf %253, %254 : vector<8x256xf32>
    %cst_8 = arith.constant 0.000000e+00 : f32
    %256 = vector.broadcast %cst_8 : f32 to vector<8x256xf32>
    %257 = arith.maximumf %255, %256 : vector<8x256xf32>
    %258 = arith.addf %1, %257 : vector<8x256xf32>
    %cst_9 = arith.constant 0.000000e+00 : f32
    %259 = vector.broadcast %cst_9 : f32 to vector<8x256xf32>
    %c17_i32_10 = arith.constant 17 : i32
    %260 = tpu.dynamic_rotate %258 by %c17_i32_10 dim 1 : vector<8x256xf32>, i32 -> vector<8x256xf32>
    %261 = vector.broadcast %41 : vector<1x256xf32> to vector<8x256xf32>
    %262 = arith.mulf %260, %261 : vector<8x256xf32>
    %263 = vector.extract_strided_slice %262 {offsets = [0, 0], sizes = [1, 256], strides = [1, 1]} : vector<8x256xf32> to vector<1x256xf32>
    %264 = vector.broadcast %5 : vector<8x1xf32> to vector<8x256xf32>
    %265 = vector.broadcast %263 : vector<1x256xf32> to vector<8x256xf32>
    %266 = arith.mulf %264, %265 : vector<8x256xf32>
    %267 = arith.addf %259, %266 : vector<8x256xf32>
    %268 = vector.extract_strided_slice %262 {offsets = [1, 0], sizes = [1, 256], strides = [1, 1]} : vector<8x256xf32> to vector<1x256xf32>
    %269 = vector.broadcast %6 : vector<8x1xf32> to vector<8x256xf32>
    %270 = vector.broadcast %268 : vector<1x256xf32> to vector<8x256xf32>
    %271 = arith.mulf %269, %270 : vector<8x256xf32>
    %272 = arith.addf %267, %271 : vector<8x256xf32>
    %273 = vector.extract_strided_slice %262 {offsets = [2, 0], sizes = [1, 256], strides = [1, 1]} : vector<8x256xf32> to vector<1x256xf32>
    %274 = vector.broadcast %7 : vector<8x1xf32> to vector<8x256xf32>
    %275 = vector.broadcast %273 : vector<1x256xf32> to vector<8x256xf32>
    %276 = arith.mulf %274, %275 : vector<8x256xf32>
    %277 = arith.addf %272, %276 : vector<8x256xf32>
    %278 = vector.extract_strided_slice %262 {offsets = [3, 0], sizes = [1, 256], strides = [1, 1]} : vector<8x256xf32> to vector<1x256xf32>
    %279 = vector.broadcast %8 : vector<8x1xf32> to vector<8x256xf32>
    %280 = vector.broadcast %278 : vector<1x256xf32> to vector<8x256xf32>
    %281 = arith.mulf %279, %280 : vector<8x256xf32>
    %282 = arith.addf %277, %281 : vector<8x256xf32>
    %c16_i32_11 = arith.constant 16 : i32
    %283 = tpu.dynamic_rotate %258 by %c16_i32_11 dim 1 : vector<8x256xf32>, i32 -> vector<8x256xf32>
    %284 = vector.broadcast %42 : vector<1x256xf32> to vector<8x256xf32>
    %285 = arith.mulf %283, %284 : vector<8x256xf32>
    %286 = vector.extract_strided_slice %285 {offsets = [0, 0], sizes = [1, 256], strides = [1, 1]} : vector<8x256xf32> to vector<1x256xf32>
    %287 = vector.broadcast %9 : vector<8x1xf32> to vector<8x256xf32>
    %288 = vector.broadcast %286 : vector<1x256xf32> to vector<8x256xf32>
    %289 = arith.mulf %287, %288 : vector<8x256xf32>
    %290 = arith.addf %282, %289 : vector<8x256xf32>
    %291 = vector.extract_strided_slice %285 {offsets = [1, 0], sizes = [1, 256], strides = [1, 1]} : vector<8x256xf32> to vector<1x256xf32>
    %292 = vector.broadcast %10 : vector<8x1xf32> to vector<8x256xf32>
    %293 = vector.broadcast %291 : vector<1x256xf32> to vector<8x256xf32>
    %294 = arith.mulf %292, %293 : vector<8x256xf32>
    %295 = arith.addf %290, %294 : vector<8x256xf32>
    %296 = vector.extract_strided_slice %285 {offsets = [2, 0], sizes = [1, 256], strides = [1, 1]} : vector<8x256xf32> to vector<1x256xf32>
    %297 = vector.broadcast %11 : vector<8x1xf32> to vector<8x256xf32>
    %298 = vector.broadcast %296 : vector<1x256xf32> to vector<8x256xf32>
    %299 = arith.mulf %297, %298 : vector<8x256xf32>
    %300 = arith.addf %295, %299 : vector<8x256xf32>
    %301 = vector.extract_strided_slice %285 {offsets = [3, 0], sizes = [1, 256], strides = [1, 1]} : vector<8x256xf32> to vector<1x256xf32>
    %302 = vector.broadcast %12 : vector<8x1xf32> to vector<8x256xf32>
    %303 = vector.broadcast %301 : vector<1x256xf32> to vector<8x256xf32>
    %304 = arith.mulf %302, %303 : vector<8x256xf32>
    %305 = arith.addf %300, %304 : vector<8x256xf32>
    %c15_i32_12 = arith.constant 15 : i32
    %306 = tpu.dynamic_rotate %258 by %c15_i32_12 dim 1 : vector<8x256xf32>, i32 -> vector<8x256xf32>
    %307 = vector.broadcast %43 : vector<1x256xf32> to vector<8x256xf32>
    %308 = arith.mulf %306, %307 : vector<8x256xf32>
    %309 = vector.extract_strided_slice %308 {offsets = [0, 0], sizes = [1, 256], strides = [1, 1]} : vector<8x256xf32> to vector<1x256xf32>
    %310 = vector.broadcast %13 : vector<8x1xf32> to vector<8x256xf32>
    %311 = vector.broadcast %309 : vector<1x256xf32> to vector<8x256xf32>
    %312 = arith.mulf %310, %311 : vector<8x256xf32>
    %313 = arith.addf %305, %312 : vector<8x256xf32>
    %314 = vector.extract_strided_slice %308 {offsets = [1, 0], sizes = [1, 256], strides = [1, 1]} : vector<8x256xf32> to vector<1x256xf32>
    %315 = vector.broadcast %14 : vector<8x1xf32> to vector<8x256xf32>
    %316 = vector.broadcast %314 : vector<1x256xf32> to vector<8x256xf32>
    %317 = arith.mulf %315, %316 : vector<8x256xf32>
    %318 = arith.addf %313, %317 : vector<8x256xf32>
    %319 = vector.extract_strided_slice %308 {offsets = [2, 0], sizes = [1, 256], strides = [1, 1]} : vector<8x256xf32> to vector<1x256xf32>
    %320 = vector.broadcast %15 : vector<8x1xf32> to vector<8x256xf32>
    %321 = vector.broadcast %319 : vector<1x256xf32> to vector<8x256xf32>
    %322 = arith.mulf %320, %321 : vector<8x256xf32>
    %323 = arith.addf %318, %322 : vector<8x256xf32>
    %324 = vector.extract_strided_slice %308 {offsets = [3, 0], sizes = [1, 256], strides = [1, 1]} : vector<8x256xf32> to vector<1x256xf32>
    %325 = vector.broadcast %16 : vector<8x1xf32> to vector<8x256xf32>
    %326 = vector.broadcast %324 : vector<1x256xf32> to vector<8x256xf32>
    %327 = arith.mulf %325, %326 : vector<8x256xf32>
    %328 = arith.addf %323, %327 : vector<8x256xf32>
    %c1_i32_13 = arith.constant 1 : i32
    %329 = tpu.dynamic_rotate %258 by %c1_i32_13 dim 1 : vector<8x256xf32>, i32 -> vector<8x256xf32>
    %330 = vector.broadcast %44 : vector<1x256xf32> to vector<8x256xf32>
    %331 = arith.mulf %329, %330 : vector<8x256xf32>
    %332 = vector.extract_strided_slice %331 {offsets = [0, 0], sizes = [1, 256], strides = [1, 1]} : vector<8x256xf32> to vector<1x256xf32>
    %333 = vector.broadcast %17 : vector<8x1xf32> to vector<8x256xf32>
    %334 = vector.broadcast %332 : vector<1x256xf32> to vector<8x256xf32>
    %335 = arith.mulf %333, %334 : vector<8x256xf32>
    %336 = arith.addf %328, %335 : vector<8x256xf32>
    %337 = vector.extract_strided_slice %331 {offsets = [1, 0], sizes = [1, 256], strides = [1, 1]} : vector<8x256xf32> to vector<1x256xf32>
    %338 = vector.broadcast %18 : vector<8x1xf32> to vector<8x256xf32>
    %339 = vector.broadcast %337 : vector<1x256xf32> to vector<8x256xf32>
    %340 = arith.mulf %338, %339 : vector<8x256xf32>
    %341 = arith.addf %336, %340 : vector<8x256xf32>
    %342 = vector.extract_strided_slice %331 {offsets = [2, 0], sizes = [1, 256], strides = [1, 1]} : vector<8x256xf32> to vector<1x256xf32>
    %343 = vector.broadcast %19 : vector<8x1xf32> to vector<8x256xf32>
    %344 = vector.broadcast %342 : vector<1x256xf32> to vector<8x256xf32>
    %345 = arith.mulf %343, %344 : vector<8x256xf32>
    %346 = arith.addf %341, %345 : vector<8x256xf32>
    %347 = vector.extract_strided_slice %331 {offsets = [3, 0], sizes = [1, 256], strides = [1, 1]} : vector<8x256xf32> to vector<1x256xf32>
    %348 = vector.broadcast %20 : vector<8x1xf32> to vector<8x256xf32>
    %349 = vector.broadcast %347 : vector<1x256xf32> to vector<8x256xf32>
    %350 = arith.mulf %348, %349 : vector<8x256xf32>
    %351 = arith.addf %346, %350 : vector<8x256xf32>
    %352 = vector.extract_strided_slice %258 {offsets = [0, 0], sizes = [1, 256], strides = [1, 1]} : vector<8x256xf32> to vector<1x256xf32>
    %353 = vector.broadcast %21 : vector<8x1xf32> to vector<8x256xf32>
    %354 = vector.broadcast %352 : vector<1x256xf32> to vector<8x256xf32>
    %355 = arith.mulf %353, %354 : vector<8x256xf32>
    %356 = arith.addf %351, %355 : vector<8x256xf32>
    %357 = vector.extract_strided_slice %258 {offsets = [1, 0], sizes = [1, 256], strides = [1, 1]} : vector<8x256xf32> to vector<1x256xf32>
    %358 = vector.broadcast %22 : vector<8x1xf32> to vector<8x256xf32>
    %359 = vector.broadcast %357 : vector<1x256xf32> to vector<8x256xf32>
    %360 = arith.mulf %358, %359 : vector<8x256xf32>
    %361 = arith.addf %356, %360 : vector<8x256xf32>
    %362 = vector.extract_strided_slice %258 {offsets = [2, 0], sizes = [1, 256], strides = [1, 1]} : vector<8x256xf32> to vector<1x256xf32>
    %363 = vector.broadcast %23 : vector<8x1xf32> to vector<8x256xf32>
    %364 = vector.broadcast %362 : vector<1x256xf32> to vector<8x256xf32>
    %365 = arith.mulf %363, %364 : vector<8x256xf32>
    %366 = arith.addf %361, %365 : vector<8x256xf32>
    %367 = vector.extract_strided_slice %258 {offsets = [3, 0], sizes = [1, 256], strides = [1, 1]} : vector<8x256xf32> to vector<1x256xf32>
    %368 = vector.broadcast %24 : vector<8x1xf32> to vector<8x256xf32>
    %369 = vector.broadcast %367 : vector<1x256xf32> to vector<8x256xf32>
    %370 = arith.mulf %368, %369 : vector<8x256xf32>
    %371 = arith.addf %366, %370 : vector<8x256xf32>
    %c255_i32_14 = arith.constant 255 : i32
    %372 = tpu.dynamic_rotate %258 by %c255_i32_14 dim 1 : vector<8x256xf32>, i32 -> vector<8x256xf32>
    %373 = vector.broadcast %45 : vector<1x256xf32> to vector<8x256xf32>
    %374 = arith.mulf %372, %373 : vector<8x256xf32>
    %375 = vector.extract_strided_slice %374 {offsets = [0, 0], sizes = [1, 256], strides = [1, 1]} : vector<8x256xf32> to vector<1x256xf32>
    %376 = vector.broadcast %25 : vector<8x1xf32> to vector<8x256xf32>
    %377 = vector.broadcast %375 : vector<1x256xf32> to vector<8x256xf32>
    %378 = arith.mulf %376, %377 : vector<8x256xf32>
    %379 = arith.addf %371, %378 : vector<8x256xf32>
    %380 = vector.extract_strided_slice %374 {offsets = [1, 0], sizes = [1, 256], strides = [1, 1]} : vector<8x256xf32> to vector<1x256xf32>
    %381 = vector.broadcast %26 : vector<8x1xf32> to vector<8x256xf32>
    %382 = vector.broadcast %380 : vector<1x256xf32> to vector<8x256xf32>
    %383 = arith.mulf %381, %382 : vector<8x256xf32>
    %384 = arith.addf %379, %383 : vector<8x256xf32>
    %385 = vector.extract_strided_slice %374 {offsets = [2, 0], sizes = [1, 256], strides = [1, 1]} : vector<8x256xf32> to vector<1x256xf32>
    %386 = vector.broadcast %27 : vector<8x1xf32> to vector<8x256xf32>
    %387 = vector.broadcast %385 : vector<1x256xf32> to vector<8x256xf32>
    %388 = arith.mulf %386, %387 : vector<8x256xf32>
    %389 = arith.addf %384, %388 : vector<8x256xf32>
    %390 = vector.extract_strided_slice %374 {offsets = [3, 0], sizes = [1, 256], strides = [1, 1]} : vector<8x256xf32> to vector<1x256xf32>
    %391 = vector.broadcast %28 : vector<8x1xf32> to vector<8x256xf32>
    %392 = vector.broadcast %390 : vector<1x256xf32> to vector<8x256xf32>
    %393 = arith.mulf %391, %392 : vector<8x256xf32>
    %394 = arith.addf %389, %393 : vector<8x256xf32>
    %c241_i32_15 = arith.constant 241 : i32
    %395 = tpu.dynamic_rotate %258 by %c241_i32_15 dim 1 : vector<8x256xf32>, i32 -> vector<8x256xf32>
    %396 = vector.broadcast %46 : vector<1x256xf32> to vector<8x256xf32>
    %397 = arith.mulf %395, %396 : vector<8x256xf32>
    %398 = vector.extract_strided_slice %397 {offsets = [0, 0], sizes = [1, 256], strides = [1, 1]} : vector<8x256xf32> to vector<1x256xf32>
    %399 = vector.broadcast %29 : vector<8x1xf32> to vector<8x256xf32>
    %400 = vector.broadcast %398 : vector<1x256xf32> to vector<8x256xf32>
    %401 = arith.mulf %399, %400 : vector<8x256xf32>
    %402 = arith.addf %394, %401 : vector<8x256xf32>
    %403 = vector.extract_strided_slice %397 {offsets = [1, 0], sizes = [1, 256], strides = [1, 1]} : vector<8x256xf32> to vector<1x256xf32>
    %404 = vector.broadcast %30 : vector<8x1xf32> to vector<8x256xf32>
    %405 = vector.broadcast %403 : vector<1x256xf32> to vector<8x256xf32>
    %406 = arith.mulf %404, %405 : vector<8x256xf32>
    %407 = arith.addf %402, %406 : vector<8x256xf32>
    %408 = vector.extract_strided_slice %397 {offsets = [2, 0], sizes = [1, 256], strides = [1, 1]} : vector<8x256xf32> to vector<1x256xf32>
    %409 = vector.broadcast %31 : vector<8x1xf32> to vector<8x256xf32>
    %410 = vector.broadcast %408 : vector<1x256xf32> to vector<8x256xf32>
    %411 = arith.mulf %409, %410 : vector<8x256xf32>
    %412 = arith.addf %407, %411 : vector<8x256xf32>
    %413 = vector.extract_strided_slice %397 {offsets = [3, 0], sizes = [1, 256], strides = [1, 1]} : vector<8x256xf32> to vector<1x256xf32>
    %414 = vector.broadcast %32 : vector<8x1xf32> to vector<8x256xf32>
    %415 = vector.broadcast %413 : vector<1x256xf32> to vector<8x256xf32>
    %416 = arith.mulf %414, %415 : vector<8x256xf32>
    %417 = arith.addf %412, %416 : vector<8x256xf32>
    %c240_i32_16 = arith.constant 240 : i32
    %418 = tpu.dynamic_rotate %258 by %c240_i32_16 dim 1 : vector<8x256xf32>, i32 -> vector<8x256xf32>
    %419 = vector.broadcast %47 : vector<1x256xf32> to vector<8x256xf32>
    %420 = arith.mulf %418, %419 : vector<8x256xf32>
    %421 = vector.extract_strided_slice %420 {offsets = [0, 0], sizes = [1, 256], strides = [1, 1]} : vector<8x256xf32> to vector<1x256xf32>
    %422 = vector.broadcast %33 : vector<8x1xf32> to vector<8x256xf32>
    %423 = vector.broadcast %421 : vector<1x256xf32> to vector<8x256xf32>
    %424 = arith.mulf %422, %423 : vector<8x256xf32>
    %425 = arith.addf %417, %424 : vector<8x256xf32>
    %426 = vector.extract_strided_slice %420 {offsets = [1, 0], sizes = [1, 256], strides = [1, 1]} : vector<8x256xf32> to vector<1x256xf32>
    %427 = vector.broadcast %34 : vector<8x1xf32> to vector<8x256xf32>
    %428 = vector.broadcast %426 : vector<1x256xf32> to vector<8x256xf32>
    %429 = arith.mulf %427, %428 : vector<8x256xf32>
    %430 = arith.addf %425, %429 : vector<8x256xf32>
    %431 = vector.extract_strided_slice %420 {offsets = [2, 0], sizes = [1, 256], strides = [1, 1]} : vector<8x256xf32> to vector<1x256xf32>
    %432 = vector.broadcast %35 : vector<8x1xf32> to vector<8x256xf32>
    %433 = vector.broadcast %431 : vector<1x256xf32> to vector<8x256xf32>
    %434 = arith.mulf %432, %433 : vector<8x256xf32>
    %435 = arith.addf %430, %434 : vector<8x256xf32>
    %436 = vector.extract_strided_slice %420 {offsets = [3, 0], sizes = [1, 256], strides = [1, 1]} : vector<8x256xf32> to vector<1x256xf32>
    %437 = vector.broadcast %36 : vector<8x1xf32> to vector<8x256xf32>
    %438 = vector.broadcast %436 : vector<1x256xf32> to vector<8x256xf32>
    %439 = arith.mulf %437, %438 : vector<8x256xf32>
    %440 = arith.addf %435, %439 : vector<8x256xf32>
    %c239_i32_17 = arith.constant 239 : i32
    %441 = tpu.dynamic_rotate %258 by %c239_i32_17 dim 1 : vector<8x256xf32>, i32 -> vector<8x256xf32>
    %442 = vector.broadcast %48 : vector<1x256xf32> to vector<8x256xf32>
    %443 = arith.mulf %441, %442 : vector<8x256xf32>
    %444 = vector.extract_strided_slice %443 {offsets = [0, 0], sizes = [1, 256], strides = [1, 1]} : vector<8x256xf32> to vector<1x256xf32>
    %445 = vector.broadcast %37 : vector<8x1xf32> to vector<8x256xf32>
    %446 = vector.broadcast %444 : vector<1x256xf32> to vector<8x256xf32>
    %447 = arith.mulf %445, %446 : vector<8x256xf32>
    %448 = arith.addf %440, %447 : vector<8x256xf32>
    %449 = vector.extract_strided_slice %443 {offsets = [1, 0], sizes = [1, 256], strides = [1, 1]} : vector<8x256xf32> to vector<1x256xf32>
    %450 = vector.broadcast %38 : vector<8x1xf32> to vector<8x256xf32>
    %451 = vector.broadcast %449 : vector<1x256xf32> to vector<8x256xf32>
    %452 = arith.mulf %450, %451 : vector<8x256xf32>
    %453 = arith.addf %448, %452 : vector<8x256xf32>
    %454 = vector.extract_strided_slice %443 {offsets = [2, 0], sizes = [1, 256], strides = [1, 1]} : vector<8x256xf32> to vector<1x256xf32>
    %455 = vector.broadcast %39 : vector<8x1xf32> to vector<8x256xf32>
    %456 = vector.broadcast %454 : vector<1x256xf32> to vector<8x256xf32>
    %457 = arith.mulf %455, %456 : vector<8x256xf32>
    %458 = arith.addf %453, %457 : vector<8x256xf32>
    %459 = vector.extract_strided_slice %443 {offsets = [3, 0], sizes = [1, 256], strides = [1, 1]} : vector<8x256xf32> to vector<1x256xf32>
    %460 = vector.broadcast %40 : vector<8x1xf32> to vector<8x256xf32>
    %461 = vector.broadcast %459 : vector<1x256xf32> to vector<8x256xf32>
    %462 = arith.mulf %460, %461 : vector<8x256xf32>
    %463 = arith.addf %458, %462 : vector<8x256xf32>
    %464 = vector.broadcast %3 : vector<8x1xf32> to vector<8x256xf32>
    %465 = arith.addf %463, %464 : vector<8x256xf32>
    %cst_18 = arith.constant 0.000000e+00 : f32
    %466 = vector.broadcast %cst_18 : f32 to vector<8x256xf32>
    %467 = arith.maximumf %465, %466 : vector<8x256xf32>
    %468 = arith.addf %1, %467 : vector<8x256xf32>
    %cst_19 = arith.constant 0.000000e+00 : f32
    %469 = vector.broadcast %cst_19 : f32 to vector<8x256xf32>
    %c17_i32_20 = arith.constant 17 : i32
    %470 = tpu.dynamic_rotate %468 by %c17_i32_20 dim 1 : vector<8x256xf32>, i32 -> vector<8x256xf32>
    %471 = vector.broadcast %41 : vector<1x256xf32> to vector<8x256xf32>
    %472 = arith.mulf %470, %471 : vector<8x256xf32>
    %473 = vector.extract_strided_slice %472 {offsets = [0, 0], sizes = [1, 256], strides = [1, 1]} : vector<8x256xf32> to vector<1x256xf32>
    %474 = vector.broadcast %5 : vector<8x1xf32> to vector<8x256xf32>
    %475 = vector.broadcast %473 : vector<1x256xf32> to vector<8x256xf32>
    %476 = arith.mulf %474, %475 : vector<8x256xf32>
    %477 = arith.addf %469, %476 : vector<8x256xf32>
    %478 = vector.extract_strided_slice %472 {offsets = [1, 0], sizes = [1, 256], strides = [1, 1]} : vector<8x256xf32> to vector<1x256xf32>
    %479 = vector.broadcast %6 : vector<8x1xf32> to vector<8x256xf32>
    %480 = vector.broadcast %478 : vector<1x256xf32> to vector<8x256xf32>
    %481 = arith.mulf %479, %480 : vector<8x256xf32>
    %482 = arith.addf %477, %481 : vector<8x256xf32>
    %483 = vector.extract_strided_slice %472 {offsets = [2, 0], sizes = [1, 256], strides = [1, 1]} : vector<8x256xf32> to vector<1x256xf32>
    %484 = vector.broadcast %7 : vector<8x1xf32> to vector<8x256xf32>
    %485 = vector.broadcast %483 : vector<1x256xf32> to vector<8x256xf32>
    %486 = arith.mulf %484, %485 : vector<8x256xf32>
    %487 = arith.addf %482, %486 : vector<8x256xf32>
    %488 = vector.extract_strided_slice %472 {offsets = [3, 0], sizes = [1, 256], strides = [1, 1]} : vector<8x256xf32> to vector<1x256xf32>
    %489 = vector.broadcast %8 : vector<8x1xf32> to vector<8x256xf32>
    %490 = vector.broadcast %488 : vector<1x256xf32> to vector<8x256xf32>
    %491 = arith.mulf %489, %490 : vector<8x256xf32>
    %492 = arith.addf %487, %491 : vector<8x256xf32>
    %c16_i32_21 = arith.constant 16 : i32
    %493 = tpu.dynamic_rotate %468 by %c16_i32_21 dim 1 : vector<8x256xf32>, i32 -> vector<8x256xf32>
    %494 = vector.broadcast %42 : vector<1x256xf32> to vector<8x256xf32>
    %495 = arith.mulf %493, %494 : vector<8x256xf32>
    %496 = vector.extract_strided_slice %495 {offsets = [0, 0], sizes = [1, 256], strides = [1, 1]} : vector<8x256xf32> to vector<1x256xf32>
    %497 = vector.broadcast %9 : vector<8x1xf32> to vector<8x256xf32>
    %498 = vector.broadcast %496 : vector<1x256xf32> to vector<8x256xf32>
    %499 = arith.mulf %497, %498 : vector<8x256xf32>
    %500 = arith.addf %492, %499 : vector<8x256xf32>
    %501 = vector.extract_strided_slice %495 {offsets = [1, 0], sizes = [1, 256], strides = [1, 1]} : vector<8x256xf32> to vector<1x256xf32>
    %502 = vector.broadcast %10 : vector<8x1xf32> to vector<8x256xf32>
    %503 = vector.broadcast %501 : vector<1x256xf32> to vector<8x256xf32>
    %504 = arith.mulf %502, %503 : vector<8x256xf32>
    %505 = arith.addf %500, %504 : vector<8x256xf32>
    %506 = vector.extract_strided_slice %495 {offsets = [2, 0], sizes = [1, 256], strides = [1, 1]} : vector<8x256xf32> to vector<1x256xf32>
    %507 = vector.broadcast %11 : vector<8x1xf32> to vector<8x256xf32>
    %508 = vector.broadcast %506 : vector<1x256xf32> to vector<8x256xf32>
    %509 = arith.mulf %507, %508 : vector<8x256xf32>
    %510 = arith.addf %505, %509 : vector<8x256xf32>
    %511 = vector.extract_strided_slice %495 {offsets = [3, 0], sizes = [1, 256], strides = [1, 1]} : vector<8x256xf32> to vector<1x256xf32>
    %512 = vector.broadcast %12 : vector<8x1xf32> to vector<8x256xf32>
    %513 = vector.broadcast %511 : vector<1x256xf32> to vector<8x256xf32>
    %514 = arith.mulf %512, %513 : vector<8x256xf32>
    %515 = arith.addf %510, %514 : vector<8x256xf32>
    %c15_i32_22 = arith.constant 15 : i32
    %516 = tpu.dynamic_rotate %468 by %c15_i32_22 dim 1 : vector<8x256xf32>, i32 -> vector<8x256xf32>
    %517 = vector.broadcast %43 : vector<1x256xf32> to vector<8x256xf32>
    %518 = arith.mulf %516, %517 : vector<8x256xf32>
    %519 = vector.extract_strided_slice %518 {offsets = [0, 0], sizes = [1, 256], strides = [1, 1]} : vector<8x256xf32> to vector<1x256xf32>
    %520 = vector.broadcast %13 : vector<8x1xf32> to vector<8x256xf32>
    %521 = vector.broadcast %519 : vector<1x256xf32> to vector<8x256xf32>
    %522 = arith.mulf %520, %521 : vector<8x256xf32>
    %523 = arith.addf %515, %522 : vector<8x256xf32>
    %524 = vector.extract_strided_slice %518 {offsets = [1, 0], sizes = [1, 256], strides = [1, 1]} : vector<8x256xf32> to vector<1x256xf32>
    %525 = vector.broadcast %14 : vector<8x1xf32> to vector<8x256xf32>
    %526 = vector.broadcast %524 : vector<1x256xf32> to vector<8x256xf32>
    %527 = arith.mulf %525, %526 : vector<8x256xf32>
    %528 = arith.addf %523, %527 : vector<8x256xf32>
    %529 = vector.extract_strided_slice %518 {offsets = [2, 0], sizes = [1, 256], strides = [1, 1]} : vector<8x256xf32> to vector<1x256xf32>
    %530 = vector.broadcast %15 : vector<8x1xf32> to vector<8x256xf32>
    %531 = vector.broadcast %529 : vector<1x256xf32> to vector<8x256xf32>
    %532 = arith.mulf %530, %531 : vector<8x256xf32>
    %533 = arith.addf %528, %532 : vector<8x256xf32>
    %534 = vector.extract_strided_slice %518 {offsets = [3, 0], sizes = [1, 256], strides = [1, 1]} : vector<8x256xf32> to vector<1x256xf32>
    %535 = vector.broadcast %16 : vector<8x1xf32> to vector<8x256xf32>
    %536 = vector.broadcast %534 : vector<1x256xf32> to vector<8x256xf32>
    %537 = arith.mulf %535, %536 : vector<8x256xf32>
    %538 = arith.addf %533, %537 : vector<8x256xf32>
    %c1_i32_23 = arith.constant 1 : i32
    %539 = tpu.dynamic_rotate %468 by %c1_i32_23 dim 1 : vector<8x256xf32>, i32 -> vector<8x256xf32>
    %540 = vector.broadcast %44 : vector<1x256xf32> to vector<8x256xf32>
    %541 = arith.mulf %539, %540 : vector<8x256xf32>
    %542 = vector.extract_strided_slice %541 {offsets = [0, 0], sizes = [1, 256], strides = [1, 1]} : vector<8x256xf32> to vector<1x256xf32>
    %543 = vector.broadcast %17 : vector<8x1xf32> to vector<8x256xf32>
    %544 = vector.broadcast %542 : vector<1x256xf32> to vector<8x256xf32>
    %545 = arith.mulf %543, %544 : vector<8x256xf32>
    %546 = arith.addf %538, %545 : vector<8x256xf32>
    %547 = vector.extract_strided_slice %541 {offsets = [1, 0], sizes = [1, 256], strides = [1, 1]} : vector<8x256xf32> to vector<1x256xf32>
    %548 = vector.broadcast %18 : vector<8x1xf32> to vector<8x256xf32>
    %549 = vector.broadcast %547 : vector<1x256xf32> to vector<8x256xf32>
    %550 = arith.mulf %548, %549 : vector<8x256xf32>
    %551 = arith.addf %546, %550 : vector<8x256xf32>
    %552 = vector.extract_strided_slice %541 {offsets = [2, 0], sizes = [1, 256], strides = [1, 1]} : vector<8x256xf32> to vector<1x256xf32>
    %553 = vector.broadcast %19 : vector<8x1xf32> to vector<8x256xf32>
    %554 = vector.broadcast %552 : vector<1x256xf32> to vector<8x256xf32>
    %555 = arith.mulf %553, %554 : vector<8x256xf32>
    %556 = arith.addf %551, %555 : vector<8x256xf32>
    %557 = vector.extract_strided_slice %541 {offsets = [3, 0], sizes = [1, 256], strides = [1, 1]} : vector<8x256xf32> to vector<1x256xf32>
    %558 = vector.broadcast %20 : vector<8x1xf32> to vector<8x256xf32>
    %559 = vector.broadcast %557 : vector<1x256xf32> to vector<8x256xf32>
    %560 = arith.mulf %558, %559 : vector<8x256xf32>
    %561 = arith.addf %556, %560 : vector<8x256xf32>
    %562 = vector.extract_strided_slice %468 {offsets = [0, 0], sizes = [1, 256], strides = [1, 1]} : vector<8x256xf32> to vector<1x256xf32>
    %563 = vector.broadcast %21 : vector<8x1xf32> to vector<8x256xf32>
    %564 = vector.broadcast %562 : vector<1x256xf32> to vector<8x256xf32>
    %565 = arith.mulf %563, %564 : vector<8x256xf32>
    %566 = arith.addf %561, %565 : vector<8x256xf32>
    %567 = vector.extract_strided_slice %468 {offsets = [1, 0], sizes = [1, 256], strides = [1, 1]} : vector<8x256xf32> to vector<1x256xf32>
    %568 = vector.broadcast %22 : vector<8x1xf32> to vector<8x256xf32>
    %569 = vector.broadcast %567 : vector<1x256xf32> to vector<8x256xf32>
    %570 = arith.mulf %568, %569 : vector<8x256xf32>
    %571 = arith.addf %566, %570 : vector<8x256xf32>
    %572 = vector.extract_strided_slice %468 {offsets = [2, 0], sizes = [1, 256], strides = [1, 1]} : vector<8x256xf32> to vector<1x256xf32>
    %573 = vector.broadcast %23 : vector<8x1xf32> to vector<8x256xf32>
    %574 = vector.broadcast %572 : vector<1x256xf32> to vector<8x256xf32>
    %575 = arith.mulf %573, %574 : vector<8x256xf32>
    %576 = arith.addf %571, %575 : vector<8x256xf32>
    %577 = vector.extract_strided_slice %468 {offsets = [3, 0], sizes = [1, 256], strides = [1, 1]} : vector<8x256xf32> to vector<1x256xf32>
    %578 = vector.broadcast %24 : vector<8x1xf32> to vector<8x256xf32>
    %579 = vector.broadcast %577 : vector<1x256xf32> to vector<8x256xf32>
    %580 = arith.mulf %578, %579 : vector<8x256xf32>
    %581 = arith.addf %576, %580 : vector<8x256xf32>
    %c255_i32_24 = arith.constant 255 : i32
    %582 = tpu.dynamic_rotate %468 by %c255_i32_24 dim 1 : vector<8x256xf32>, i32 -> vector<8x256xf32>
    %583 = vector.broadcast %45 : vector<1x256xf32> to vector<8x256xf32>
    %584 = arith.mulf %582, %583 : vector<8x256xf32>
    %585 = vector.extract_strided_slice %584 {offsets = [0, 0], sizes = [1, 256], strides = [1, 1]} : vector<8x256xf32> to vector<1x256xf32>
    %586 = vector.broadcast %25 : vector<8x1xf32> to vector<8x256xf32>
    %587 = vector.broadcast %585 : vector<1x256xf32> to vector<8x256xf32>
    %588 = arith.mulf %586, %587 : vector<8x256xf32>
    %589 = arith.addf %581, %588 : vector<8x256xf32>
    %590 = vector.extract_strided_slice %584 {offsets = [1, 0], sizes = [1, 256], strides = [1, 1]} : vector<8x256xf32> to vector<1x256xf32>
    %591 = vector.broadcast %26 : vector<8x1xf32> to vector<8x256xf32>
    %592 = vector.broadcast %590 : vector<1x256xf32> to vector<8x256xf32>
    %593 = arith.mulf %591, %592 : vector<8x256xf32>
    %594 = arith.addf %589, %593 : vector<8x256xf32>
    %595 = vector.extract_strided_slice %584 {offsets = [2, 0], sizes = [1, 256], strides = [1, 1]} : vector<8x256xf32> to vector<1x256xf32>
    %596 = vector.broadcast %27 : vector<8x1xf32> to vector<8x256xf32>
    %597 = vector.broadcast %595 : vector<1x256xf32> to vector<8x256xf32>
    %598 = arith.mulf %596, %597 : vector<8x256xf32>
    %599 = arith.addf %594, %598 : vector<8x256xf32>
    %600 = vector.extract_strided_slice %584 {offsets = [3, 0], sizes = [1, 256], strides = [1, 1]} : vector<8x256xf32> to vector<1x256xf32>
    %601 = vector.broadcast %28 : vector<8x1xf32> to vector<8x256xf32>
    %602 = vector.broadcast %600 : vector<1x256xf32> to vector<8x256xf32>
    %603 = arith.mulf %601, %602 : vector<8x256xf32>
    %604 = arith.addf %599, %603 : vector<8x256xf32>
    %c241_i32_25 = arith.constant 241 : i32
    %605 = tpu.dynamic_rotate %468 by %c241_i32_25 dim 1 : vector<8x256xf32>, i32 -> vector<8x256xf32>
    %606 = vector.broadcast %46 : vector<1x256xf32> to vector<8x256xf32>
    %607 = arith.mulf %605, %606 : vector<8x256xf32>
    %608 = vector.extract_strided_slice %607 {offsets = [0, 0], sizes = [1, 256], strides = [1, 1]} : vector<8x256xf32> to vector<1x256xf32>
    %609 = vector.broadcast %29 : vector<8x1xf32> to vector<8x256xf32>
    %610 = vector.broadcast %608 : vector<1x256xf32> to vector<8x256xf32>
    %611 = arith.mulf %609, %610 : vector<8x256xf32>
    %612 = arith.addf %604, %611 : vector<8x256xf32>
    %613 = vector.extract_strided_slice %607 {offsets = [1, 0], sizes = [1, 256], strides = [1, 1]} : vector<8x256xf32> to vector<1x256xf32>
    %614 = vector.broadcast %30 : vector<8x1xf32> to vector<8x256xf32>
    %615 = vector.broadcast %613 : vector<1x256xf32> to vector<8x256xf32>
    %616 = arith.mulf %614, %615 : vector<8x256xf32>
    %617 = arith.addf %612, %616 : vector<8x256xf32>
    %618 = vector.extract_strided_slice %607 {offsets = [2, 0], sizes = [1, 256], strides = [1, 1]} : vector<8x256xf32> to vector<1x256xf32>
    %619 = vector.broadcast %31 : vector<8x1xf32> to vector<8x256xf32>
    %620 = vector.broadcast %618 : vector<1x256xf32> to vector<8x256xf32>
    %621 = arith.mulf %619, %620 : vector<8x256xf32>
    %622 = arith.addf %617, %621 : vector<8x256xf32>
    %623 = vector.extract_strided_slice %607 {offsets = [3, 0], sizes = [1, 256], strides = [1, 1]} : vector<8x256xf32> to vector<1x256xf32>
    %624 = vector.broadcast %32 : vector<8x1xf32> to vector<8x256xf32>
    %625 = vector.broadcast %623 : vector<1x256xf32> to vector<8x256xf32>
    %626 = arith.mulf %624, %625 : vector<8x256xf32>
    %627 = arith.addf %622, %626 : vector<8x256xf32>
    %c240_i32_26 = arith.constant 240 : i32
    %628 = tpu.dynamic_rotate %468 by %c240_i32_26 dim 1 : vector<8x256xf32>, i32 -> vector<8x256xf32>
    %629 = vector.broadcast %47 : vector<1x256xf32> to vector<8x256xf32>
    %630 = arith.mulf %628, %629 : vector<8x256xf32>
    %631 = vector.extract_strided_slice %630 {offsets = [0, 0], sizes = [1, 256], strides = [1, 1]} : vector<8x256xf32> to vector<1x256xf32>
    %632 = vector.broadcast %33 : vector<8x1xf32> to vector<8x256xf32>
    %633 = vector.broadcast %631 : vector<1x256xf32> to vector<8x256xf32>
    %634 = arith.mulf %632, %633 : vector<8x256xf32>
    %635 = arith.addf %627, %634 : vector<8x256xf32>
    %636 = vector.extract_strided_slice %630 {offsets = [1, 0], sizes = [1, 256], strides = [1, 1]} : vector<8x256xf32> to vector<1x256xf32>
    %637 = vector.broadcast %34 : vector<8x1xf32> to vector<8x256xf32>
    %638 = vector.broadcast %636 : vector<1x256xf32> to vector<8x256xf32>
    %639 = arith.mulf %637, %638 : vector<8x256xf32>
    %640 = arith.addf %635, %639 : vector<8x256xf32>
    %641 = vector.extract_strided_slice %630 {offsets = [2, 0], sizes = [1, 256], strides = [1, 1]} : vector<8x256xf32> to vector<1x256xf32>
    %642 = vector.broadcast %35 : vector<8x1xf32> to vector<8x256xf32>
    %643 = vector.broadcast %641 : vector<1x256xf32> to vector<8x256xf32>
    %644 = arith.mulf %642, %643 : vector<8x256xf32>
    %645 = arith.addf %640, %644 : vector<8x256xf32>
    %646 = vector.extract_strided_slice %630 {offsets = [3, 0], sizes = [1, 256], strides = [1, 1]} : vector<8x256xf32> to vector<1x256xf32>
    %647 = vector.broadcast %36 : vector<8x1xf32> to vector<8x256xf32>
    %648 = vector.broadcast %646 : vector<1x256xf32> to vector<8x256xf32>
    %649 = arith.mulf %647, %648 : vector<8x256xf32>
    %650 = arith.addf %645, %649 : vector<8x256xf32>
    %c239_i32_27 = arith.constant 239 : i32
    %651 = tpu.dynamic_rotate %468 by %c239_i32_27 dim 1 : vector<8x256xf32>, i32 -> vector<8x256xf32>
    %652 = vector.broadcast %48 : vector<1x256xf32> to vector<8x256xf32>
    %653 = arith.mulf %651, %652 : vector<8x256xf32>
    %654 = vector.extract_strided_slice %653 {offsets = [0, 0], sizes = [1, 256], strides = [1, 1]} : vector<8x256xf32> to vector<1x256xf32>
    %655 = vector.broadcast %37 : vector<8x1xf32> to vector<8x256xf32>
    %656 = vector.broadcast %654 : vector<1x256xf32> to vector<8x256xf32>
    %657 = arith.mulf %655, %656 : vector<8x256xf32>
    %658 = arith.addf %650, %657 : vector<8x256xf32>
    %659 = vector.extract_strided_slice %653 {offsets = [1, 0], sizes = [1, 256], strides = [1, 1]} : vector<8x256xf32> to vector<1x256xf32>
    %660 = vector.broadcast %38 : vector<8x1xf32> to vector<8x256xf32>
    %661 = vector.broadcast %659 : vector<1x256xf32> to vector<8x256xf32>
    %662 = arith.mulf %660, %661 : vector<8x256xf32>
    %663 = arith.addf %658, %662 : vector<8x256xf32>
    %664 = vector.extract_strided_slice %653 {offsets = [2, 0], sizes = [1, 256], strides = [1, 1]} : vector<8x256xf32> to vector<1x256xf32>
    %665 = vector.broadcast %39 : vector<8x1xf32> to vector<8x256xf32>
    %666 = vector.broadcast %664 : vector<1x256xf32> to vector<8x256xf32>
    %667 = arith.mulf %665, %666 : vector<8x256xf32>
    %668 = arith.addf %663, %667 : vector<8x256xf32>
    %669 = vector.extract_strided_slice %653 {offsets = [3, 0], sizes = [1, 256], strides = [1, 1]} : vector<8x256xf32> to vector<1x256xf32>
    %670 = vector.broadcast %40 : vector<8x1xf32> to vector<8x256xf32>
    %671 = vector.broadcast %669 : vector<1x256xf32> to vector<8x256xf32>
    %672 = arith.mulf %670, %671 : vector<8x256xf32>
    %673 = arith.addf %668, %672 : vector<8x256xf32>
    %674 = vector.broadcast %3 : vector<8x1xf32> to vector<8x256xf32>
    %675 = arith.addf %673, %674 : vector<8x256xf32>
    %cst_28 = arith.constant 0.000000e+00 : f32
    %676 = vector.broadcast %cst_28 : f32 to vector<8x256xf32>
    %677 = arith.maximumf %675, %676 : vector<8x256xf32>
    %c0_29 = arith.constant 0 : index
    %c0_30 = arith.constant 0 : index
    %c0_31 = arith.constant 0 : index
    %678 = vector.load %arg5[%c0_29, %c0_30, %c0_31] : memref<1x8x256xf32, #tpu.memory_space<vmem>>, vector<1x8x256xf32>
    %679 = vector.shape_cast %678 : vector<1x8x256xf32> to vector<8x256xf32>
    %680 = vector.shape_cast %677 : vector<8x256xf32> to vector<1x8x256xf32>
    tpu.vector_store %arg5[%c0_29, %c0_30, %c0_31], %680 {strides = array<i32>} : memref<1x8x256xf32, #tpu.memory_space<vmem>>, vector<1x8x256xf32>,
    return
  }
  func.func @transform_0(%arg0: i32) -> (i32, i32, i32) {
    %c0_i32 = arith.constant 0 : i32
    %c0_i32_0 = arith.constant 0 : i32
    %c0_i32_1 = arith.constant 0 : i32
    return %arg0, %c0_i32, %c0_i32_0 : i32, i32, i32
  }
  func.func @transform_1(%arg0: i32) -> (i32, i32) {
    %c0_i32 = arith.constant 0 : i32
    %c0_i32_0 = arith.constant 0 : i32
    %c0_i32_1 = arith.constant 0 : i32
    return %c0_i32, %c0_i32_0 : i32, i32
  }
  func.func @transform_2(%arg0: i32) -> (i32, i32) {
    %c0_i32 = arith.constant 0 : i32
    %c0_i32_0 = arith.constant 0 : i32
    %c0_i32_1 = arith.constant 0 : i32
    return %c0_i32, %c0_i32_0 : i32, i32
  }
  func.func @transform_3(%arg0: i32) -> (i32, i32) {
    %c0_i32 = arith.constant 0 : i32
    %c0_i32_0 = arith.constant 0 : i32
    %c0_i32_1 = arith.constant 0 : i32
    return %c0_i32, %c0_i32_0 : i32, i32
  }
  func.func @transform_4(%arg0: i32) -> (i32, i32, i32) {
    %c0_i32 = arith.constant 0 : i32
    %c0_i32_0 = arith.constant 0 : i32
    %c0_i32_1 = arith.constant 0 : i32
    return %arg0, %c0_i32, %c0_i32_0 : i32, i32, i32
  }
}

</mosaic_0001>

<llo_original>
// kernel: tpu_custom_call.1
$region0: #{tpu_custom_call.1}
  #allocation0 [shape = 'u32[]', space=smem, size = 0x4, offset = 0x4, fixed_abs, tag = 'smem constant byte address 0x4 - core index']
  #allocation1 [shape = 'u32[144,128]{1,0:T(1,128)}', space=vmem, size = 0x12000, scoped, tag = 'internal scratch']
  %s0 = inlined_call_operand.hbm [shape: f32[2,8,256], index: 0, kind: input, shape index: {}]
  %s1 = inlined_call_operand.vmem [shape: f32[8,36], index: 1, kind: input, shape index: {}]
  %s2 = inlined_call_operand.vmem [shape: f32[8,1], index: 2, kind: input, shape index: {}]
  %s3 = inlined_call_operand.hbm [shape: f32[9,256], index: 3, kind: input, shape index: {}]
  %s4 = inlined_call_operand.hbm [shape: f32[2,8,256], index: 4, kind: output, shape index: {}]
  %s5 = sld [smem:[#allocation0]]
  $region57: #{tpu_custom_call.1} parent=0
    _
  %s7 = ssub.s32 1, %s5
  %s8 = scalar_select 0, %s7, %s5
  $region1: #{tpu_custom_call.1} parent=0
    #allocation2 [shape = 'u8[16384]{0}', space=vmem, size = 0x4000, scoped, tag = 'input window, operand 0']
    #allocation3 [shape = 's32[2]{0}', space=sflag, size = 0x8, scoped, tag = 'scoped memory for tpu_custom_call.1']
    #allocation4 [shape = 's32[2]{0}', space=sflag, size = 0x8, scoped, tag = 'scoped memory for tpu_custom_call.1']
    #allocation5 [shape = 'u8[16384]{0}', space=vmem, size = 0x4000, scoped, tag = 'input window, operand 3, single buffered']
    #allocation6 [shape = 's32[1]{0}', space=sflag, size = 0x4, scoped, tag = 'scoped memory for tpu_custom_call.1']
    #allocation7 [shape = 'u8[16384]{0}', space=vmem, size = 0x4000, scoped, tag = 'output window, operand 0']
    %9 = vsyncpa [#allocation3], 0
    %s10 = scalar_lea.sflag [#allocation3], 1
    %11 = vsyncpa %s10, 0
    %12 = vsyncpa [#allocation6], 0
    %13 = vsyncpa [#allocation4], 0
    %s14 = scalar_lea.sflag [#allocation4], 1
    %15 = vsyncpa %s14, 0
    loop: start=0, step=1, limit=4
    $region2: #{tpu_custom_call.1} parent=1 // loop_pre_header
      _
    $region3: #{tpu_custom_call.1} parent=1 // loop_header
      %s17 = sphi 0, %s21
      %p18 = scmp.ge.s32.totalorder %s17, 4
      %s27 = sphi 0, %s29
      %s30 = sphi 0, %s27
      %s31 = sphi 0, %s30
      %s47 = sphi 0, %s31
      %s51 = sphi 0, %s51
      %s53 = sphi 0, %s51
      %s54 = sphi 0, %s53
      %s68 = sphi 0, %s54
      %s72 = sphi 0, %s72
      %s74 = sphi 0, %s72
      %s75 = sphi 0, %s74
      %s89 = sphi 0, %s75
      %s93 = sphi 0, %s93
      %s95 = sphi 0, %s93
      %s96 = sphi 0, %s95
      %s110 = sphi 0, %s96
      %s116 = sphi 0, %s118
      %s119 = sphi 0, %s116
      %s120 = sphi 0, %s119
      %s136 = sphi 0, %s120
    $region4: #{tpu_custom_call.1} parent=1 // loop_header_branch
      %20 = sbr.rel (%p18) target = $region8
    $region5: #{tpu_custom_call.1} parent=1 // loop_body
      %s22 = ssub.s32 %s17, 1
      %s23 = ssub.s32 %s17, 2
      %s24 = sadd.s32 %s17, 1
      %s25 = ssub.s32 %s17, %s24
      %p26 = scmp.eq.s32.totalorder %s25, 0
      %s28 = sadd.s32 %s27, 1
      %s29 = scalar_select %p26, %s27, %s28
      %p32 = pneg %p26
      %p33 = scmp.eq.s32.totalorder %s17, 1
      %p34 = por %p32, %p33
      %p35 = scmp.ne.s32.totalorder %s27, %s30
      %p36 = scmp.eq.s32.totalorder %s17, 0
      %p37 = por %p35, %p36
      %p38 = scmp.ne.s32.totalorder %s27, %s30
      %p39 = scmp.eq.s32.totalorder %s22, 1
      %p40 = por %p38, %p39
      %p41 = scmp.ne.s32.totalorder %s30, %s31
      %p42 = scmp.eq.s32.totalorder %s22, 0
      %p43 = por %p41, %p42
      %p44 = scmp.ne.s32.totalorder %s30, %s31
      %p45 = scmp.eq.s32.totalorder %s23, 1
      %p46 = por %p44, %p45
      %p48 = scmp.ne.s32.totalorder %s31, %s47
      %p49 = scmp.eq.s32.totalorder %s23, 0
      %p50 = por %p48, %p49
      %s52 = sadd.s32 %s51, 1
      %p55 = scmp.eq.s32.totalorder %s17, 1
      %p56 = scmp.ne.s32.totalorder %s51, %s53
      %p57 = scmp.eq.s32.totalorder %s17, 0
      %p58 = por %p56, %p57
      %p59 = scmp.ne.s32.totalorder %s51, %s53
      %p60 = scmp.eq.s32.totalorder %s22, 1
      %p61 = por %p59, %p60
      %p62 = scmp.ne.s32.totalorder %s53, %s54
      %p63 = scmp.eq.s32.totalorder %s22, 0
      %p64 = por %p62, %p63
      %p65 = scmp.ne.s32.totalorder %s53, %s54
      %p66 = scmp.eq.s32.totalorder %s23, 1
      %p67 = por %p65, %p66
      %p69 = scmp.ne.s32.totalorder %s54, %s68
      %p70 = scmp.eq.s32.totalorder %s23, 0
      %p71 = por %p69, %p70
      %s73 = sadd.s32 %s72, 1
      %p76 = scmp.eq.s32.totalorder %s17, 1
      %p77 = scmp.ne.s32.totalorder %s72, %s74
      %p78 = scmp.eq.s32.totalorder %s17, 0
      %p79 = por %p77, %p78
      %p80 = scmp.ne.s32.totalorder %s72, %s74
      %p81 = scmp.eq.s32.totalorder %s22, 1
      %p82 = por %p80, %p81
      %p83 = scmp.ne.s32.totalorder %s74, %s75
      %p84 = scmp.eq.s32.totalorder %s22, 0
      %p85 = por %p83, %p84
      %p86 = scmp.ne.s32.totalorder %s74, %s75
      %p87 = scmp.eq.s32.totalorder %s23, 1
      %p88 = por %p86, %p87
      %p90 = scmp.ne.s32.totalorder %s75, %s89
      %p91 = scmp.eq.s32.totalorder %s23, 0
      %p92 = por %p90, %p91
      %s94 = sadd.s32 %s93, 1
      %p97 = scmp.eq.s32.totalorder %s17, 1
      %p98 = scmp.ne.s32.totalorder %s93, %s95
      %p99 = scmp.eq.s32.totalorder %s17, 0
      %p100 = por %p98, %p99
      %p101 = scmp.ne.s32.totalorder %s93, %s95
      %p102 = scmp.eq.s32.totalorder %s22, 1
      %p103 = por %p101, %p102
      %p104 = scmp.ne.s32.totalorder %s95, %s96
      %p105 = scmp.eq.s32.totalorder %s22, 0
      %p106 = por %p104, %p105
      %p107 = scmp.ne.s32.totalorder %s95, %s96
      %p108 = scmp.eq.s32.totalorder %s23, 1
      %p109 = por %p107, %p108
      %p111 = scmp.ne.s32.totalorder %s96, %s110
      %p112 = scmp.eq.s32.totalorder %s23, 0
      %p113 = por %p111, %p112
      %s114 = ssub.s32 %s17, %s24
      %p115 = scmp.eq.s32.totalorder %s114, 0
      %s117 = sadd.s32 %s116, 1
      %s118 = scalar_select %p115, %s116, %s117
      %p121 = pneg %p115
      %p122 = scmp.eq.s32.totalorder %s17, 1
      %p123 = por %p121, %p122
      %p124 = scmp.ne.s32.totalorder %s116, %s119
      %p125 = scmp.eq.s32.totalorder %s17, 0
      %p126 = por %p124, %p125
      %p127 = scmp.ne.s32.totalorder %s116, %s119
      %p128 = scmp.eq.s32.totalorder %s22, 1
      %p129 = por %p127, %p128
      %p130 = scmp.ne.s32.totalorder %s119, %s120
      %p131 = scmp.eq.s32.totalorder %s22, 0
      %p132 = por %p130, %p131
      %p133 = scmp.ne.s32.totalorder %s119, %s120
      %p134 = scmp.eq.s32.totalorder %s23, 1
      %p135 = por %p133, %p134
      %p137 = scmp.ne.s32.totalorder %s120, %s136
      %p138 = scmp.eq.s32.totalorder %s23, 0
      %p139 = por %p137, %p138
      %p140 = scmp.le.s32.totalorder 1, %s17
      %p141 = scmp.lt.s32.totalorder %s17, 3
      %p142 = pnand %p140, %p141
      %p143 = pneg %p142
      // Predicated region
      $region9: #{tpu_custom_call.1} parent=5 // pred_check
        _
      $region10: #{tpu_custom_call.1} parent=5 // pred_check_branch
        %145 = sbr.rel (%p142) target = $region12
      $region11: #{tpu_custom_call.1} parent=5 // pred_region
        %s146 = ssub.s32 %s17, 1
        // Predicated region
        $region13: #{tpu_custom_call.1} parent=11 // pred_check
          %p147 = pneg %p64
        $region14: #{tpu_custom_call.1} parent=11 // pred_check_branch
          %149 = sbr.rel (%p147) target = $region16
        $region15: #{tpu_custom_call.1} parent=11 // pred_region
          _
        $region16: #{tpu_custom_call.1} parent=11 // pred_fallthru
          _
        // Predicated region
        $region17: #{tpu_custom_call.1} parent=11 // pred_check
          %p150 = pneg %p85
        $region18: #{tpu_custom_call.1} parent=11 // pred_check_branch
          %152 = sbr.rel (%p150) target = $region20
        $region19: #{tpu_custom_call.1} parent=11 // pred_region
          _
        $region20: #{tpu_custom_call.1} parent=11 // pred_fallthru
          _
        // Predicated region
        $region21: #{tpu_custom_call.1} parent=11 // pred_check
          %p153 = pneg %p106
        $region22: #{tpu_custom_call.1} parent=11 // pred_check_branch
          %155 = sbr.rel (%p153) target = $region24
        $region23: #{tpu_custom_call.1} parent=11 // pred_region
          %s157 = ssub.s32 512, 512
          %158 = vsyncadd [#allocation6], %s157
          %s159 = sshll.u32 [#allocation5], 4
          %s160 = int_to_ptr.vmem [resolvable:$true] %s159
          %165 = dma.hbm_to_vmem [thread:$0]  %s3, 512, %s160, [#allocation6], 256, 256, 16
        $region24: #{tpu_custom_call.1} parent=11 // pred_fallthru
          _
      $region12: #{tpu_custom_call.1} parent=5 // pred_fallthru
        _
      %p166 = scmp.lt.s32.totalorder %s17, 2
      // Predicated region
      $region25: #{tpu_custom_call.1} parent=5 // pred_check
        %p167 = pneg %p166
      $region26: #{tpu_custom_call.1} parent=5 // pred_check_branch
        %169 = sbr.rel (%p167) target = $region28
      $region27: #{tpu_custom_call.1} parent=5 // pred_region
        // Predicated region
        $region29: #{tpu_custom_call.1} parent=27 // pred_check
          %p170 = pneg %p37
        $region30: #{tpu_custom_call.1} parent=27 // pred_check_branch
          %172 = sbr.rel (%p170) target = $region32
        $region31: #{tpu_custom_call.1} parent=27 // pred_region
          %s173 = sand.u32 %s27, 1
          %s174 = scalar_lea.sflag [#allocation3], %s173
          %s175 = sand.u32 %s27, 1
          %s176 = smul.addr %s175, 16
          %s177 = scalar_lea.vmem [#allocation2], %s176
          %s179 = ssub.s32 256, 256
          %180 = vsyncadd %s174, %s179
          %s181 = smul.addr %s17, 2
          %s182 = smul.addr %s181, 128
          %s183 = scalar_lea.hbm %s0, %s182
          %s185 = sshll.u32 %s177, 4
          %s186 = int_to_ptr.vmem [resolvable:$true] %s185
          %188 = dma.hbm_to_vmem [thread:$0]  %s183, 256, %s186, %s174
        $region32: #{tpu_custom_call.1} parent=27 // pred_fallthru
          _
      $region28: #{tpu_custom_call.1} parent=5 // pred_fallthru
        _
      %p189 = scmp.le.s32.totalorder 1, %s17
      %p190 = scmp.lt.s32.totalorder %s17, 3
      %p191 = pnand %p189, %p190
      %p192 = pneg %p191
      // Predicated region
      $region33: #{tpu_custom_call.1} parent=5 // pred_check
        _
      $region34: #{tpu_custom_call.1} parent=5 // pred_check_branch
        %194 = sbr.rel (%p191) target = $region36
      $region35: #{tpu_custom_call.1} parent=5 // pred_region
        %s195 = ssub.s32 %s17, 1
        %s196 = sand.u32 %s30, 1
        %s197 = scalar_lea.sflag [#allocation3], %s196
        %s198 = sand.u32 %s30, 1
        %s199 = smul.addr %s198, 16
        %s200 = scalar_lea.vmem [#allocation2], %s199
        // Predicated region
        $region37: #{tpu_custom_call.1} parent=35 // pred_check
          %p201 = pneg %p43
        $region38: #{tpu_custom_call.1} parent=35 // pred_check_branch
          %203 = sbr.rel (%p201) target = $region40
        $region39: #{tpu_custom_call.1} parent=35 // pred_region
          %204 = dma.done %s197, 256
        $region40: #{tpu_custom_call.1} parent=35 // pred_fallthru
          _
        // Predicated region
        $region41: #{tpu_custom_call.1} parent=35 // pred_check
          %p205 = pneg %p106
        $region42: #{tpu_custom_call.1} parent=35 // pred_check_branch
          %207 = sbr.rel (%p205) target = $region44
        $region43: #{tpu_custom_call.1} parent=35 // pred_region
          %208 = dma.done [#allocation6], 512
        $region44: #{tpu_custom_call.1} parent=35 // pred_fallthru
          _
        %s209 = sand.u32 %s30, 1
        %s210 = scalar_lea.sflag [#allocation3], %s209
        %s211 = sand.u32 %s30, 1
        %s212 = smul.addr %s211, 16
        %s213 = scalar_lea.vmem [#allocation2], %s212
        %p214 = pneg %p43
        %p215 = pneg %p40
        %p216 = pneg %p64
        %p217 = pneg %p61
        %p218 = pneg %p85
        %p219 = pneg %p82
        %p220 = pneg %p106
        %p221 = pneg %p103
        %p222 = pneg %p132
        %p223 = pneg %p129
        %s224 = sand.u32 %s119, 1
        %s225 = scalar_lea.sflag [#allocation4], %s224
        %s226 = sand.u32 %s119, 1
        %s227 = smul.addr %s226, 16
        %s228 = scalar_lea.vmem [#allocation7], %s227
        %v229 = vld [vmem:[%s200] sm:$0xff]
        %v230 = vld [vmem:[%s200 + $0x8] sm:$0xff]
        %v231 = vld [vmem:[%s1] sm:$0xff]
        %v232 = vld [vmem:[%s2] sm:$0xff]
        %v233 = vld [vmem:[#allocation5] sm:$0xff]
        %v234 = vld [vmem:[#allocation5 + $0x8] sm:$0xff]
        %v235 = vld [vmem:[#allocation5 + $0x10] sm:$0x1]
        %v236 = vld [vmem:[#allocation5 + $0x18] sm:$0x1]
        %237 = vrot.lane.b32.xlu0 %v229, 17
        %v238 = vpop.permute.xlu0 %237
        %239 = vrot.lane.b32.xlu0 %v230, 17
        %v240 = vpop.permute.xlu0 %239
        %v241 = vlaneseq
        %v242 = vand.u32 %v241, 127
        %vm243 = vcmp.lt.s32.totalorder %v242, 17
        %v244 = vsel %vm243, %v238, %v240
        %v245 = vsel %vm243, %v240, %v238
        %v246 = vlaneseq
        %v247 = vshrl.u32 %v246, 7
        %v248 = vsub.s32 0, %v247
        %v249 = vrot.slane %v233, %v248
        %v250 = vlaneseq
        %v251 = vshrl.u32 %v250, 7
        %v252 = vsub.s32 0, %v251
        %v253 = vrot.slane %v234, %v252
        %v254 = vmul.f32 %v245, %v249
        %v255 = vmul.f32 %v244, %v253
        %257 = vset.pattern.permute.xlu0 0
        %258 = vperm.xlu0 %257, %v231
        %v259 = vpop.permute.xlu0 %258
        %v261 = vlaneseq
        %v262 = vshrl.u32 %v261, 7
        %v263 = vsub.s32 0, %v262
        %v264 = vrot.slane %v254, %v263
        %v265 = vlaneseq
        %v266 = vshrl.u32 %v265, 7
        %v267 = vsub.s32 0, %v266
        %v268 = vrot.slane %v255, %v267
        %v269 = vmul.f32 %v259, %v264
        %v270 = vmul.f32 %v259, %v268
        %v271 = vadd.f32 %v269, 0.0
        %v272 = vadd.f32 %v270, 0.0
        %273 = vset.pattern.permute.xlu0 1
        %274 = vperm.xlu0 %273, %v231
        %v275 = vpop.permute.xlu0 %274
        %v277 = vlaneseq
        %v278 = vshrl.u32 %v277, 7
        %v279 = vsub.s32 1, %v278
        %v280 = vrot.slane %v254, %v279
        %v281 = vlaneseq
        %v282 = vshrl.u32 %v281, 7
        %v283 = vsub.s32 1, %v282
        %v284 = vrot.slane %v255, %v283
        %v285 = vmul.f32 %v275, %v280
        %v286 = vmul.f32 %v275, %v284
        %v287 = vadd.f32 %v271, %v285
        %v288 = vadd.f32 %v272, %v286
        %289 = vset.pattern.permute.xlu0 2
        %290 = vperm.xlu0 %289, %v231
        %v291 = vpop.permute.xlu0 %290
        %v293 = vlaneseq
        %v294 = vshrl.u32 %v293, 7
        %v295 = vsub.s32 2, %v294
        %v296 = vrot.slane %v254, %v295
        %v297 = vlaneseq
        %v298 = vshrl.u32 %v297, 7
        %v299 = vsub.s32 2, %v298
        %v300 = vrot.slane %v255, %v299
        %v301 = vmul.f32 %v291, %v296
        %v302 = vmul.f32 %v291, %v300
        %v303 = vadd.f32 %v287, %v301
        %v304 = vadd.f32 %v288, %v302
        %305 = vset.pattern.permute.xlu0 3
        %306 = vperm.xlu0 %305, %v231
        %v307 = vpop.permute.xlu0 %306
        %v309 = vlaneseq
        %v310 = vshrl.u32 %v309, 7
        %v311 = vsub.s32 3, %v310
        %v312 = vrot.slane %v254, %v311
        %v313 = vlaneseq
        %v314 = vshrl.u32 %v313, 7
        %v315 = vsub.s32 3, %v314
        %v316 = vrot.slane %v255, %v315
        %v317 = vmul.f32 %v307, %v312
        %v318 = vmul.f32 %v307, %v316
        %v319 = vadd.f32 %v303, %v317
        %v320 = vadd.f32 %v304, %v318
        %321 = vrot.lane.b32.xlu0 %v229, 16
        %v322 = vpop.permute.xlu0 %321
        %323 = vrot.lane.b32.xlu0 %v230, 16
        %v324 = vpop.permute.xlu0 %323
        %vm325 = vcmp.lt.s32.totalorder %v242, 16
        %v326 = vsel %vm325, %v322, %v324
        %v327 = vsel %vm325, %v324, %v322
        %v328 = vlaneseq
        %v329 = vshrl.u32 %v328, 7
        %v330 = vsub.s32 1, %v329
        %v331 = vrot.slane %v233, %v330
        %v332 = vlaneseq
        %v333 = vshrl.u32 %v332, 7
        %v334 = vsub.s32 1, %v333
        %v335 = vrot.slane %v234, %v334
        %v336 = vmul.f32 %v327, %v331
        %v337 = vmul.f32 %v326, %v335
        %338 = vset.pattern.permute.xlu0 4
        %339 = vperm.xlu0 %338, %v231
        %v340 = vpop.permute.xlu0 %339
        %v342 = vlaneseq
        %v343 = vshrl.u32 %v342, 7
        %v344 = vsub.s32 0, %v343
        %v345 = vrot.slane %v336, %v344
        %v346 = vlaneseq
        %v347 = vshrl.u32 %v346, 7
        %v348 = vsub.s32 0, %v347
        %v349 = vrot.slane %v337, %v348
        %v350 = vmul.f32 %v340, %v345
        %v351 = vmul.f32 %v340, %v349
        %v352 = vadd.f32 %v319, %v350
        %v353 = vadd.f32 %v320, %v351
        %354 = vset.pattern.permute.xlu0 5
        %355 = vperm.xlu0 %354, %v231
        %v356 = vpop.permute.xlu0 %355
        %v358 = vlaneseq
        %v359 = vshrl.u32 %v358, 7
        %v360 = vsub.s32 1, %v359
        %v361 = vrot.slane %v336, %v360
        %v362 = vlaneseq
        %v363 = vshrl.u32 %v362, 7
        %v364 = vsub.s32 1, %v363
        %v365 = vrot.slane %v337, %v364
        %v366 = vmul.f32 %v356, %v361
        %v367 = vmul.f32 %v356, %v365
        %v368 = vadd.f32 %v352, %v366
        %v369 = vadd.f32 %v353, %v367
        %370 = vset.pattern.permute.xlu0 6
        %371 = vperm.xlu0 %370, %v231
        %v372 = vpop.permute.xlu0 %371
        %v374 = vlaneseq
        %v375 = vshrl.u32 %v374, 7
        %v376 = vsub.s32 2, %v375
        %v377 = vrot.slane %v336, %v376
        %v378 = vlaneseq
        %v379 = vshrl.u32 %v378, 7
        %v380 = vsub.s32 2, %v379
        %v381 = vrot.slane %v337, %v380
        %v382 = vmul.f32 %v372, %v377
        %v383 = vmul.f32 %v372, %v381
        %v384 = vadd.f32 %v368, %v382
        %v385 = vadd.f32 %v369, %v383
        %386 = vset.pattern.permute.xlu0 7
        %387 = vperm.xlu0 %386, %v231
        %v388 = vpop.permute.xlu0 %387
        %v390 = vlaneseq
        %v391 = vshrl.u32 %v390, 7
        %v392 = vsub.s32 3, %v391
        %v393 = vrot.slane %v336, %v392
        %v394 = vlaneseq
        %v395 = vshrl.u32 %v394, 7
        %v396 = vsub.s32 3, %v395
        %v397 = vrot.slane %v337, %v396
        %v398 = vmul.f32 %v388, %v393
        %v399 = vmul.f32 %v388, %v397
        %v400 = vadd.f32 %v384, %v398
        %v401 = vadd.f32 %v385, %v399
        %402 = vrot.lane.b32.xlu0 %v229, 15
        %v403 = vpop.permute.xlu0 %402
        %404 = vrot.lane.b32.xlu0 %v230, 15
        %v405 = vpop.permute.xlu0 %404
        %vm406 = vcmp.lt.s32.totalorder %v242, 15
        %v407 = vsel %vm406, %v403, %v405
        %v408 = vsel %vm406, %v405, %v403
        %v409 = vlaneseq
        %v410 = vshrl.u32 %v409, 7
        %v411 = vsub.s32 2, %v410
        %v412 = vrot.slane %v233, %v411
        %v413 = vlaneseq
        %v414 = vshrl.u32 %v413, 7
        %v415 = vsub.s32 2, %v414
        %v416 = vrot.slane %v234, %v415
        %v417 = vmul.f32 %v408, %v412
        %v418 = vmul.f32 %v407, %v416
        %419 = vset.pattern.permute.xlu0 8
        %420 = vperm.xlu0 %419, %v231
        %v421 = vpop.permute.xlu0 %420
        %v423 = vlaneseq
        %v424 = vshrl.u32 %v423, 7
        %v425 = vsub.s32 0, %v424
        %v426 = vrot.slane %v417, %v425
        %v427 = vlaneseq
        %v428 = vshrl.u32 %v427, 7
        %v429 = vsub.s32 0, %v428
        %v430 = vrot.slane %v418, %v429
        %v431 = vmul.f32 %v421, %v426
        %v432 = vmul.f32 %v421, %v430
        %v433 = vadd.f32 %v400, %v431
        %v434 = vadd.f32 %v401, %v432
        %435 = vset.pattern.permute.xlu0 9
        %436 = vperm.xlu0 %435, %v231
        %v437 = vpop.permute.xlu0 %436
        %v439 = vlaneseq
        %v440 = vshrl.u32 %v439, 7
        %v441 = vsub.s32 1, %v440
        %v442 = vrot.slane %v417, %v441
        %v443 = vlaneseq
        %v444 = vshrl.u32 %v443, 7
        %v445 = vsub.s32 1, %v444
        %v446 = vrot.slane %v418, %v445
        %v447 = vmul.f32 %v437, %v442
        %v448 = vmul.f32 %v437, %v446
        %v449 = vadd.f32 %v433, %v447
        %v450 = vadd.f32 %v434, %v448
        %451 = vset.pattern.permute.xlu0 10
        %452 = vperm.xlu0 %451, %v231
        %v453 = vpop.permute.xlu0 %452
        %v455 = vlaneseq
        %v456 = vshrl.u32 %v455, 7
        %v457 = vsub.s32 2, %v456
        %v458 = vrot.slane %v417, %v457
        %v459 = vlaneseq
        %v460 = vshrl.u32 %v459, 7
        %v461 = vsub.s32 2, %v460
        %v462 = vrot.slane %v418, %v461
        %v463 = vmul.f32 %v453, %v458
        %v464 = vmul.f32 %v453, %v462
        %v465 = vadd.f32 %v449, %v463
        %v466 = vadd.f32 %v450, %v464
        %467 = vset.pattern.permute.xlu0 11
        %468 = vperm.xlu0 %467, %v231
        %v469 = vpop.permute.xlu0 %468
        %v471 = vlaneseq
        %v472 = vshrl.u32 %v471, 7
        %v473 = vsub.s32 3, %v472
        %v474 = vrot.slane %v417, %v473
        %v475 = vlaneseq
        %v476 = vshrl.u32 %v475, 7
        %v477 = vsub.s32 3, %v476
        %v478 = vrot.slane %v418, %v477
        %v479 = vmul.f32 %v469, %v474
        %v480 = vmul.f32 %v469, %v478
        %v481 = vadd.f32 %v465, %v479
        %v482 = vadd.f32 %v466, %v480
        %483 = vrot.lane.b32.xlu0 %v229, 1
        %v484 = vpop.permute.xlu0 %483
        %485 = vrot.lane.b32.xlu0 %v230, 1
        %v486 = vpop.permute.xlu0 %485
        %vm487 = vcmp.lt.s32.totalorder %v242, 1
        %v488 = vsel %vm487, %v484, %v486
        %v489 = vsel %vm487, %v486, %v484
        %v490 = vlaneseq
        %v491 = vshrl.u32 %v490, 7
        %v492 = vsub.s32 3, %v491
        %v493 = vrot.slane %v233, %v492
        %v494 = vlaneseq
        %v495 = vshrl.u32 %v494, 7
        %v496 = vsub.s32 3, %v495
        %v497 = vrot.slane %v234, %v496
        %v498 = vmul.f32 %v489, %v493
        %v499 = vmul.f32 %v488, %v497
        %500 = vset.pattern.permute.xlu0 12
        %501 = vperm.xlu0 %500, %v231
        %v502 = vpop.permute.xlu0 %501
        %v504 = vlaneseq
        %v505 = vshrl.u32 %v504, 7
        %v506 = vsub.s32 0, %v505
        %v507 = vrot.slane %v498, %v506
        %v508 = vlaneseq
        %v509 = vshrl.u32 %v508, 7
        %v510 = vsub.s32 0, %v509
        %v511 = vrot.slane %v499, %v510
        %v512 = vmul.f32 %v502, %v507
        %v513 = vmul.f32 %v502, %v511
        %v514 = vadd.f32 %v481, %v512
        %v515 = vadd.f32 %v482, %v513
        %516 = vset.pattern.permute.xlu0 13
        %517 = vperm.xlu0 %516, %v231
        %v518 = vpop.permute.xlu0 %517
        %v520 = vlaneseq
        %v521 = vshrl.u32 %v520, 7
        %v522 = vsub.s32 1, %v521
        %v523 = vrot.slane %v498, %v522
        %v524 = vlaneseq
        %v525 = vshrl.u32 %v524, 7
        %v526 = vsub.s32 1, %v525
        %v527 = vrot.slane %v499, %v526
        %v528 = vmul.f32 %v518, %v523
        %v529 = vmul.f32 %v518, %v527
        %v530 = vadd.f32 %v514, %v528
        %v531 = vadd.f32 %v515, %v529
        %532 = vset.pattern.permute.xlu0 14
        %533 = vperm.xlu0 %532, %v231
        %v534 = vpop.permute.xlu0 %533
        %v536 = vlaneseq
        %v537 = vshrl.u32 %v536, 7
        %v538 = vsub.s32 2, %v537
        %v539 = vrot.slane %v498, %v538
        %v540 = vlaneseq
        %v541 = vshrl.u32 %v540, 7
        %v542 = vsub.s32 2, %v541
        %v543 = vrot.slane %v499, %v542
        %v544 = vmul.f32 %v534, %v539
        %v545 = vmul.f32 %v534, %v543
        %v546 = vadd.f32 %v530, %v544
        %v547 = vadd.f32 %v531, %v545
        %548 = vset.pattern.permute.xlu0 15
        %549 = vperm.xlu0 %548, %v231
        %v550 = vpop.permute.xlu0 %549
        %v552 = vlaneseq
        %v553 = vshrl.u32 %v552, 7
        %v554 = vsub.s32 3, %v553
        %v555 = vrot.slane %v498, %v554
        %v556 = vlaneseq
        %v557 = vshrl.u32 %v556, 7
        %v558 = vsub.s32 3, %v557
        %v559 = vrot.slane %v499, %v558
        %v560 = vmul.f32 %v550, %v555
        %v561 = vmul.f32 %v550, %v559
        %v562 = vadd.f32 %v546, %v560
        %v563 = vadd.f32 %v547, %v561
        %564 = vset.pattern.permute.xlu0 16
        %565 = vperm.xlu0 %564, %v231
        %v566 = vpop.permute.xlu0 %565
        %v568 = vlaneseq
        %v569 = vshrl.u32 %v568, 7
        %v570 = vsub.s32 0, %v569
        %v571 = vrot.slane %v229, %v570
        %v572 = vlaneseq
        %v573 = vshrl.u32 %v572, 7
        %v574 = vsub.s32 0, %v573
        %v575 = vrot.slane %v230, %v574
        %v576 = vmul.f32 %v566, %v571
        %v577 = vmul.f32 %v566, %v575
        %v578 = vadd.f32 %v562, %v576
        %v579 = vadd.f32 %v563, %v577
        %580 = vset.pattern.permute.xlu0 17
        %581 = vperm.xlu0 %580, %v231
        %v582 = vpop.permute.xlu0 %581
        %v584 = vlaneseq
        %v585 = vshrl.u32 %v584, 7
        %v586 = vsub.s32 1, %v585
        %v587 = vrot.slane %v229, %v586
        %v588 = vlaneseq
        %v589 = vshrl.u32 %v588, 7
        %v590 = vsub.s32 1, %v589
        %v591 = vrot.slane %v230, %v590
        %v592 = vmul.f32 %v582, %v587
        %v593 = vmul.f32 %v582, %v591
        %v594 = vadd.f32 %v578, %v592
        %v595 = vadd.f32 %v579, %v593
        %596 = vset.pattern.permute.xlu0 18
        %597 = vperm.xlu0 %596, %v231
        %v598 = vpop.permute.xlu0 %597
        %v600 = vlaneseq
        %v601 = vshrl.u32 %v600, 7
        %v602 = vsub.s32 2, %v601
        %v603 = vrot.slane %v229, %v602
        %v604 = vlaneseq
        %v605 = vshrl.u32 %v604, 7
        %v606 = vsub.s32 2, %v605
        %v607 = vrot.slane %v230, %v606
        %v608 = vmul.f32 %v598, %v603
        %v609 = vmul.f32 %v598, %v607
        %v610 = vadd.f32 %v594, %v608
        %v611 = vadd.f32 %v595, %v609
        %612 = vset.pattern.permute.xlu0 19
        %613 = vperm.xlu0 %612, %v231
        %v614 = vpop.permute.xlu0 %613
        %v616 = vlaneseq
        %v617 = vshrl.u32 %v616, 7
        %v618 = vsub.s32 3, %v617
        %v619 = vrot.slane %v229, %v618
        %v620 = vlaneseq
        %v621 = vshrl.u32 %v620, 7
        %v622 = vsub.s32 3, %v621
        %v623 = vrot.slane %v230, %v622
        %v624 = vmul.f32 %v614, %v619
        %v625 = vmul.f32 %v614, %v623
        %v626 = vadd.f32 %v610, %v624
        %v627 = vadd.f32 %v611, %v625
        %628 = vrot.lane.b32.xlu0 %v229, 127
        %v629 = vpop.permute.xlu0 %628
        %630 = vrot.lane.b32.xlu0 %v230, 127
        %v631 = vpop.permute.xlu0 %630
        %vm632 = vcmp.lt.s32.totalorder %v242, 127
        %v633 = vsel %vm632, %v629, %v631
        %v634 = vsel %vm632, %v631, %v629
        %v635 = vlaneseq
        %v636 = vshrl.u32 %v635, 7
        %v637 = vsub.s32 5, %v636
        %v638 = vrot.slane %v233, %v637
        %v639 = vlaneseq
        %v640 = vshrl.u32 %v639, 7
        %v641 = vsub.s32 5, %v640
        %v642 = vrot.slane %v234, %v641
        %v643 = vmul.f32 %v633, %v638
        %v644 = vmul.f32 %v634, %v642
        %645 = vset.pattern.permute.xlu0 20
        %646 = vperm.xlu0 %645, %v231
        %v647 = vpop.permute.xlu0 %646
        %v649 = vlaneseq
        %v650 = vshrl.u32 %v649, 7
        %v651 = vsub.s32 0, %v650
        %v652 = vrot.slane %v643, %v651
        %v653 = vlaneseq
        %v654 = vshrl.u32 %v653, 7
        %v655 = vsub.s32 0, %v654
        %v656 = vrot.slane %v644, %v655
        %v657 = vmul.f32 %v647, %v652
        %v658 = vmul.f32 %v647, %v656
        %v659 = vadd.f32 %v626, %v657
        %v660 = vadd.f32 %v627, %v658
        %661 = vset.pattern.permute.xlu0 21
        %662 = vperm.xlu0 %661, %v231
        %v663 = vpop.permute.xlu0 %662
        %v665 = vlaneseq
        %v666 = vshrl.u32 %v665, 7
        %v667 = vsub.s32 1, %v666
        %v668 = vrot.slane %v643, %v667
        %v669 = vlaneseq
        %v670 = vshrl.u32 %v669, 7
        %v671 = vsub.s32 1, %v670
        %v672 = vrot.slane %v644, %v671
        %v673 = vmul.f32 %v663, %v668
        %v674 = vmul.f32 %v663, %v672
        %v675 = vadd.f32 %v659, %v673
        %v676 = vadd.f32 %v660, %v674
        %677 = vset.pattern.permute.xlu0 22
        %678 = vperm.xlu0 %677, %v231
        %v679 = vpop.permute.xlu0 %678
        %v681 = vlaneseq
        %v682 = vshrl.u32 %v681, 7
        %v683 = vsub.s32 2, %v682
        %v684 = vrot.slane %v643, %v683
        %v685 = vlaneseq
        %v686 = vshrl.u32 %v685, 7
        %v687 = vsub.s32 2, %v686
        %v688 = vrot.slane %v644, %v687
        %v689 = vmul.f32 %v679, %v684
        %v690 = vmul.f32 %v679, %v688
        %v691 = vadd.f32 %v675, %v689
        %v692 = vadd.f32 %v676, %v690
        %693 = vset.pattern.permute.xlu0 23
        %694 = vperm.xlu0 %693, %v231
        %v695 = vpop.permute.xlu0 %694
        %v697 = vlaneseq
        %v698 = vshrl.u32 %v697, 7
        %v699 = vsub.s32 3, %v698
        %v700 = vrot.slane %v643, %v699
        %v701 = vlaneseq
        %v702 = vshrl.u32 %v701, 7
        %v703 = vsub.s32 3, %v702
        %v704 = vrot.slane %v644, %v703
        %v705 = vmul.f32 %v695, %v700
        %v706 = vmul.f32 %v695, %v704
        %v707 = vadd.f32 %v691, %v705
        %v708 = vadd.f32 %v692, %v706
        %709 = vrot.lane.b32.xlu0 %v229, 113
        %v710 = vpop.permute.xlu0 %709
        %711 = vrot.lane.b32.xlu0 %v230, 113
        %v712 = vpop.permute.xlu0 %711
        %vm713 = vcmp.lt.s32.totalorder %v242, 113
        %v714 = vsel %vm713, %v710, %v712
        %v715 = vsel %vm713, %v712, %v710
        %v716 = vlaneseq
        %v717 = vshrl.u32 %v716, 7
        %v718 = vsub.s32 6, %v717
        %v719 = vrot.slane %v233, %v718
        %v720 = vlaneseq
        %v721 = vshrl.u32 %v720, 7
        %v722 = vsub.s32 6, %v721
        %v723 = vrot.slane %v234, %v722
        %v724 = vmul.f32 %v714, %v719
        %v725 = vmul.f32 %v715, %v723
        %726 = vset.pattern.permute.xlu0 24
        %727 = vperm.xlu0 %726, %v231
        %v728 = vpop.permute.xlu0 %727
        %v730 = vlaneseq
        %v731 = vshrl.u32 %v730, 7
        %v732 = vsub.s32 0, %v731
        %v733 = vrot.slane %v724, %v732
        %v734 = vlaneseq
        %v735 = vshrl.u32 %v734, 7
        %v736 = vsub.s32 0, %v735
        %v737 = vrot.slane %v725, %v736
        %v738 = vmul.f32 %v728, %v733
        %v739 = vmul.f32 %v728, %v737
        %v740 = vadd.f32 %v707, %v738
        %v741 = vadd.f32 %v708, %v739
        %742 = vset.pattern.permute.xlu0 25
        %743 = vperm.xlu0 %742, %v231
        %v744 = vpop.permute.xlu0 %743
        %v746 = vlaneseq
        %v747 = vshrl.u32 %v746, 7
        %v748 = vsub.s32 1, %v747
        %v749 = vrot.slane %v724, %v748
        %v750 = vlaneseq
        %v751 = vshrl.u32 %v750, 7
        %v752 = vsub.s32 1, %v751
        %v753 = vrot.slane %v725, %v752
        %v754 = vmul.f32 %v744, %v749
        %v755 = vmul.f32 %v744, %v753
        %v756 = vadd.f32 %v740, %v754
        %v757 = vadd.f32 %v741, %v755
        %758 = vset.pattern.permute.xlu0 26
        %759 = vperm.xlu0 %758, %v231
        %v760 = vpop.permute.xlu0 %759
        %v762 = vlaneseq
        %v763 = vshrl.u32 %v762, 7
        %v764 = vsub.s32 2, %v763
        %v765 = vrot.slane %v724, %v764
        %v766 = vlaneseq
        %v767 = vshrl.u32 %v766, 7
        %v768 = vsub.s32 2, %v767
        %v769 = vrot.slane %v725, %v768
        %v770 = vmul.f32 %v760, %v765
        %v771 = vmul.f32 %v760, %v769
        %v772 = vadd.f32 %v756, %v770
        %v773 = vadd.f32 %v757, %v771
        %774 = vset.pattern.permute.xlu0 27
        %775 = vperm.xlu0 %774, %v231
        %v776 = vpop.permute.xlu0 %775
        %v778 = vlaneseq
        %v779 = vshrl.u32 %v778, 7
        %v780 = vsub.s32 3, %v779
        %v781 = vrot.slane %v724, %v780
        %v782 = vlaneseq
        %v783 = vshrl.u32 %v782, 7
        %v784 = vsub.s32 3, %v783
        %v785 = vrot.slane %v725, %v784
        %v786 = vmul.f32 %v776, %v781
        %v787 = vmul.f32 %v776, %v785
        %v788 = vadd.f32 %v772, %v786
        %v789 = vadd.f32 %v773, %v787
        %790 = vrot.lane.b32.xlu0 %v229, 112
        %v791 = vpop.permute.xlu0 %790
        %792 = vrot.lane.b32.xlu0 %v230, 112
        %v793 = vpop.permute.xlu0 %792
        %vm794 = vcmp.lt.s32.totalorder %v242, 112
        %v795 = vsel %vm794, %v791, %v793
        %v796 = vsel %vm794, %v793, %v791
        %v797 = vlaneseq
        %v798 = vshrl.u32 %v797, 7
        %v799 = vsub.s32 7, %v798
        %v800 = vrot.slane %v233, %v799
        %v801 = vlaneseq
        %v802 = vshrl.u32 %v801, 7
        %v803 = vsub.s32 7, %v802
        %v804 = vrot.slane %v234, %v803
        %v805 = vmul.f32 %v795, %v800
        %v806 = vmul.f32 %v796, %v804
        %807 = vset.pattern.permute.xlu0 28
        %808 = vperm.xlu0 %807, %v231
        %v809 = vpop.permute.xlu0 %808
        %v811 = vlaneseq
        %v812 = vshrl.u32 %v811, 7
        %v813 = vsub.s32 0, %v812
        %v814 = vrot.slane %v805, %v813
        %v815 = vlaneseq
        %v816 = vshrl.u32 %v815, 7
        %v817 = vsub.s32 0, %v816
        %v818 = vrot.slane %v806, %v817
        %v819 = vmul.f32 %v809, %v814
        %v820 = vmul.f32 %v809, %v818
        %v821 = vadd.f32 %v788, %v819
        %v822 = vadd.f32 %v789, %v820
        %823 = vset.pattern.permute.xlu0 29
        %824 = vperm.xlu0 %823, %v231
        %v825 = vpop.permute.xlu0 %824
        %v827 = vlaneseq
        %v828 = vshrl.u32 %v827, 7
        %v829 = vsub.s32 1, %v828
        %v830 = vrot.slane %v805, %v829
        %v831 = vlaneseq
        %v832 = vshrl.u32 %v831, 7
        %v833 = vsub.s32 1, %v832
        %v834 = vrot.slane %v806, %v833
        %v835 = vmul.f32 %v825, %v830
        %v836 = vmul.f32 %v825, %v834
        %v837 = vadd.f32 %v821, %v835
        %v838 = vadd.f32 %v822, %v836
        %839 = vset.pattern.permute.xlu0 30
        %840 = vperm.xlu0 %839, %v231
        %v841 = vpop.permute.xlu0 %840
        %v843 = vlaneseq
        %v844 = vshrl.u32 %v843, 7
        %v845 = vsub.s32 2, %v844
        %v846 = vrot.slane %v805, %v845
        %v847 = vlaneseq
        %v848 = vshrl.u32 %v847, 7
        %v849 = vsub.s32 2, %v848
        %v850 = vrot.slane %v806, %v849
        %v851 = vmul.f32 %v841, %v846
        %v852 = vmul.f32 %v841, %v850
        %v853 = vadd.f32 %v837, %v851
        %v854 = vadd.f32 %v838, %v852
        %855 = vset.pattern.permute.xlu0 31
        %856 = vperm.xlu0 %855, %v231
        %v857 = vpop.permute.xlu0 %856
        %v859 = vlaneseq
        %v860 = vshrl.u32 %v859, 7
        %v861 = vsub.s32 3, %v860
        %v862 = vrot.slane %v805, %v861
        %v863 = vlaneseq
        %v864 = vshrl.u32 %v863, 7
        %v865 = vsub.s32 3, %v864
        %v866 = vrot.slane %v806, %v865
        %v867 = vmul.f32 %v857, %v862
        %v868 = vmul.f32 %v857, %v866
        %v869 = vadd.f32 %v853, %v867
        %v870 = vadd.f32 %v854, %v868
        %871 = vrot.lane.b32.xlu0 %v229, 111
        %v872 = vpop.permute.xlu0 %871
        %873 = vrot.lane.b32.xlu0 %v230, 111
        %v874 = vpop.permute.xlu0 %873
        %vm875 = vcmp.lt.s32.totalorder %v242, 111
        %v876 = vsel %vm875, %v872, %v874
        %v877 = vsel %vm875, %v874, %v872
        %v878 = vlaneseq
        %v879 = vshrl.u32 %v878, 7
        %v880 = vsub.s32 0, %v879
        %v881 = vrot.slane %v235, %v880
        %v882 = vlaneseq
        %v883 = vshrl.u32 %v882, 7
        %v884 = vsub.s32 0, %v883
        %v885 = vrot.slane %v236, %v884
        %v886 = vmul.f32 %v876, %v881
        %v887 = vmul.f32 %v877, %v885
        %888 = vset.pattern.permute.xlu0 32
        %889 = vperm.xlu0 %888, %v231
        %v890 = vpop.permute.xlu0 %889
        %v892 = vlaneseq
        %v893 = vshrl.u32 %v892, 7
        %v894 = vsub.s32 0, %v893
        %v895 = vrot.slane %v886, %v894
        %v896 = vlaneseq
        %v897 = vshrl.u32 %v896, 7
        %v898 = vsub.s32 0, %v897
        %v899 = vrot.slane %v887, %v898
        %v900 = vmul.f32 %v890, %v895
        %v901 = vmul.f32 %v890, %v899
        %v902 = vadd.f32 %v869, %v900
        %v903 = vadd.f32 %v870, %v901
        %904 = vset.pattern.permute.xlu0 33
        %905 = vperm.xlu0 %904, %v231
        %v906 = vpop.permute.xlu0 %905
        %v908 = vlaneseq
        %v909 = vshrl.u32 %v908, 7
        %v910 = vsub.s32 1, %v909
        %v911 = vrot.slane %v886, %v910
        %v912 = vlaneseq
        %v913 = vshrl.u32 %v912, 7
        %v914 = vsub.s32 1, %v913
        %v915 = vrot.slane %v887, %v914
        %v916 = vmul.f32 %v906, %v911
        %v917 = vmul.f32 %v906, %v915
        %v918 = vadd.f32 %v902, %v916
        %v919 = vadd.f32 %v903, %v917
        %920 = vset.pattern.permute.xlu0 34
        %921 = vperm.xlu0 %920, %v231
        %v922 = vpop.permute.xlu0 %921
        %v924 = vlaneseq
        %v925 = vshrl.u32 %v924, 7
        %v926 = vsub.s32 2, %v925
        %v927 = vrot.slane %v886, %v926
        %v928 = vlaneseq
        %v929 = vshrl.u32 %v928, 7
        %v930 = vsub.s32 2, %v929
        %v931 = vrot.slane %v887, %v930
        %v932 = vmul.f32 %v922, %v927
        %v933 = vmul.f32 %v922, %v931
        %v934 = vadd.f32 %v918, %v932
        %v935 = vadd.f32 %v919, %v933
        %936 = vset.pattern.permute.xlu0 35
        %937 = vperm.xlu0 %936, %v231
        %v938 = vpop.permute.xlu0 %937
        %v940 = vlaneseq
        %v941 = vshrl.u32 %v940, 7
        %v942 = vsub.s32 3, %v941
        %v943 = vrot.slane %v886, %v942
        %v944 = vlaneseq
        %v945 = vshrl.u32 %v944, 7
        %v946 = vsub.s32 3, %v945
        %v947 = vrot.slane %v887, %v946
        %v948 = vmul.f32 %v938, %v943
        %v949 = vmul.f32 %v938, %v947
        %v950 = vadd.f32 %v934, %v948
        %v951 = vadd.f32 %v935, %v949
        %953 = vset.pattern.permute.xlu0 0
        %954 = vperm.xlu0 %953, %v232
        %v955 = vpop.permute.xlu0 %954
        %v957 = vadd.f32 %v950, %v955
        %v958 = vadd.f32 %v951, %v955
        %v959 = vmax.f32 %v957, 0.0
        %v960 = vmax.f32 %v958, 0.0
        %v961 = vadd.f32 %v229, %v959
        %v962 = vadd.f32 %v230, %v960
        %963 = vrot.lane.b32.xlu0 %v961, 17
        %v964 = vpop.permute.xlu0 %963
        %965 = vrot.lane.b32.xlu0 %v962, 17
        %v966 = vpop.permute.xlu0 %965
        %v967 = vsel %vm243, %v964, %v966
        %v968 = vsel %vm243, %v966, %v964
        %v969 = vmul.f32 %v968, %v249
        %v970 = vmul.f32 %v967, %v253
        %v971 = vlaneseq
        %v972 = vshrl.u32 %v971, 7
        %v973 = vsub.s32 0, %v972
        %v974 = vrot.slane %v969, %v973
        %v975 = vlaneseq
        %v976 = vshrl.u32 %v975, 7
        %v977 = vsub.s32 0, %v976
        %v978 = vrot.slane %v970, %v977
        %v979 = vmul.f32 %v259, %v974
        %v980 = vmul.f32 %v259, %v978
        %v981 = vadd.f32 %v979, 0.0
        %v982 = vadd.f32 %v980, 0.0
        %v983 = vlaneseq
        %v984 = vshrl.u32 %v983, 7
        %v985 = vsub.s32 1, %v984
        %v986 = vrot.slane %v969, %v985
        %v987 = vlaneseq
        %v988 = vshrl.u32 %v987, 7
        %v989 = vsub.s32 1, %v988
        %v990 = vrot.slane %v970, %v989
        %v991 = vmul.f32 %v275, %v986
        %v992 = vmul.f32 %v275, %v990
        %v993 = vadd.f32 %v981, %v991
        %v994 = vadd.f32 %v982, %v992
        %v995 = vlaneseq
        %v996 = vshrl.u32 %v995, 7
        %v997 = vsub.s32 2, %v996
        %v998 = vrot.slane %v969, %v997
        %v999 = vlaneseq
        %v1000 = vshrl.u32 %v999, 7
        %v1001 = vsub.s32 2, %v1000
        %v1002 = vrot.slane %v970, %v1001
        %v1003 = vmul.f32 %v291, %v998
        %v1004 = vmul.f32 %v291, %v1002
        %v1005 = vadd.f32 %v993, %v1003
        %v1006 = vadd.f32 %v994, %v1004
        %v1007 = vlaneseq
        %v1008 = vshrl.u32 %v1007, 7
        %v1009 = vsub.s32 3, %v1008
        %v1010 = vrot.slane %v969, %v1009
        %v1011 = vlaneseq
        %v1012 = vshrl.u32 %v1011, 7
        %v1013 = vsub.s32 3, %v1012
        %v1014 = vrot.slane %v970, %v1013
        %v1015 = vmul.f32 %v307, %v1010
        %v1016 = vmul.f32 %v307, %v1014
        %v1017 = vadd.f32 %v1005, %v1015
        %v1018 = vadd.f32 %v1006, %v1016
        %1019 = vrot.lane.b32.xlu0 %v961, 16
        %v1020 = vpop.permute.xlu0 %1019
        %1021 = vrot.lane.b32.xlu0 %v962, 16
        %v1022 = vpop.permute.xlu0 %1021
        %v1023 = vsel %vm325, %v1020, %v1022
        %v1024 = vsel %vm325, %v1022, %v1020
        %v1025 = vmul.f32 %v1024, %v331
        %v1026 = vmul.f32 %v1023, %v335
        %v1027 = vlaneseq
        %v1028 = vshrl.u32 %v1027, 7
        %v1029 = vsub.s32 0, %v1028
        %v1030 = vrot.slane %v1025, %v1029
        %v1031 = vlaneseq
        %v1032 = vshrl.u32 %v1031, 7
        %v1033 = vsub.s32 0, %v1032
        %v1034 = vrot.slane %v1026, %v1033
        %v1035 = vmul.f32 %v340, %v1030
        %v1036 = vmul.f32 %v340, %v1034
        %v1037 = vadd.f32 %v1017, %v1035
        %v1038 = vadd.f32 %v1018, %v1036
        %v1039 = vlaneseq
        %v1040 = vshrl.u32 %v1039, 7
        %v1041 = vsub.s32 1, %v1040
        %v1042 = vrot.slane %v1025, %v1041
        %v1043 = vlaneseq
        %v1044 = vshrl.u32 %v1043, 7
        %v1045 = vsub.s32 1, %v1044
        %v1046 = vrot.slane %v1026, %v1045
        %v1047 = vmul.f32 %v356, %v1042
        %v1048 = vmul.f32 %v356, %v1046
        %v1049 = vadd.f32 %v1037, %v1047
        %v1050 = vadd.f32 %v1038, %v1048
        %v1051 = vlaneseq
        %v1052 = vshrl.u32 %v1051, 7
        %v1053 = vsub.s32 2, %v1052
        %v1054 = vrot.slane %v1025, %v1053
        %v1055 = vlaneseq
        %v1056 = vshrl.u32 %v1055, 7
        %v1057 = vsub.s32 2, %v1056
        %v1058 = vrot.slane %v1026, %v1057
        %v1059 = vmul.f32 %v372, %v1054
        %v1060 = vmul.f32 %v372, %v1058
        %v1061 = vadd.f32 %v1049, %v1059
        %v1062 = vadd.f32 %v1050, %v1060
        %v1063 = vlaneseq
        %v1064 = vshrl.u32 %v1063, 7
        %v1065 = vsub.s32 3, %v1064
        %v1066 = vrot.slane %v1025, %v1065
        %v1067 = vlaneseq
        %v1068 = vshrl.u32 %v1067, 7
        %v1069 = vsub.s32 3, %v1068
        %v1070 = vrot.slane %v1026, %v1069
        %v1071 = vmul.f32 %v388, %v1066
        %v1072 = vmul.f32 %v388, %v1070
        %v1073 = vadd.f32 %v1061, %v1071
        %v1074 = vadd.f32 %v1062, %v1072
        %1075 = vrot.lane.b32.xlu0 %v961, 15
        %v1076 = vpop.permute.xlu0 %1075
        %1077 = vrot.lane.b32.xlu0 %v962, 15
        %v1078 = vpop.permute.xlu0 %1077
        %v1079 = vsel %vm406, %v1076, %v1078
        %v1080 = vsel %vm406, %v1078, %v1076
        %v1081 = vmul.f32 %v1080, %v412
        %v1082 = vmul.f32 %v1079, %v416
        %v1083 = vlaneseq
        %v1084 = vshrl.u32 %v1083, 7
        %v1085 = vsub.s32 0, %v1084
        %v1086 = vrot.slane %v1081, %v1085
        %v1087 = vlaneseq
        %v1088 = vshrl.u32 %v1087, 7
        %v1089 = vsub.s32 0, %v1088
        %v1090 = vrot.slane %v1082, %v1089
        %v1091 = vmul.f32 %v421, %v1086
        %v1092 = vmul.f32 %v421, %v1090
        %v1093 = vadd.f32 %v1073, %v1091
        %v1094 = vadd.f32 %v1074, %v1092
        %v1095 = vlaneseq
        %v1096 = vshrl.u32 %v1095, 7
        %v1097 = vsub.s32 1, %v1096
        %v1098 = vrot.slane %v1081, %v1097
        %v1099 = vlaneseq
        %v1100 = vshrl.u32 %v1099, 7
        %v1101 = vsub.s32 1, %v1100
        %v1102 = vrot.slane %v1082, %v1101
        %v1103 = vmul.f32 %v437, %v1098
        %v1104 = vmul.f32 %v437, %v1102
        %v1105 = vadd.f32 %v1093, %v1103
        %v1106 = vadd.f32 %v1094, %v1104
        %v1107 = vlaneseq
        %v1108 = vshrl.u32 %v1107, 7
        %v1109 = vsub.s32 2, %v1108
        %v1110 = vrot.slane %v1081, %v1109
        %v1111 = vlaneseq
        %v1112 = vshrl.u32 %v1111, 7
        %v1113 = vsub.s32 2, %v1112
        %v1114 = vrot.slane %v1082, %v1113
        %v1115 = vmul.f32 %v453, %v1110
        %v1116 = vmul.f32 %v453, %v1114
        %v1117 = vadd.f32 %v1105, %v1115
        %v1118 = vadd.f32 %v1106, %v1116
        %v1119 = vlaneseq
        %v1120 = vshrl.u32 %v1119, 7
        %v1121 = vsub.s32 3, %v1120
        %v1122 = vrot.slane %v1081, %v1121
        %v1123 = vlaneseq
        %v1124 = vshrl.u32 %v1123, 7
        %v1125 = vsub.s32 3, %v1124
        %v1126 = vrot.slane %v1082, %v1125
        %v1127 = vmul.f32 %v469, %v1122
        %v1128 = vmul.f32 %v469, %v1126
        %v1129 = vadd.f32 %v1117, %v1127
        %v1130 = vadd.f32 %v1118, %v1128
        %1131 = vrot.lane.b32.xlu0 %v961, 1
        %v1132 = vpop.permute.xlu0 %1131
        %1133 = vrot.lane.b32.xlu0 %v962, 1
        %v1134 = vpop.permute.xlu0 %1133
        %v1135 = vsel %vm487, %v1132, %v1134
        %v1136 = vsel %vm487, %v1134, %v1132
        %v1137 = vmul.f32 %v1136, %v493
        %v1138 = vmul.f32 %v1135, %v497
        %v1139 = vlaneseq
        %v1140 = vshrl.u32 %v1139, 7
        %v1141 = vsub.s32 0, %v1140
        %v1142 = vrot.slane %v1137, %v1141
        %v1143 = vlaneseq
        %v1144 = vshrl.u32 %v1143, 7
        %v1145 = vsub.s32 0, %v1144
        %v1146 = vrot.slane %v1138, %v1145
        %v1147 = vmul.f32 %v502, %v1142
        %v1148 = vmul.f32 %v502, %v1146
        %v1149 = vadd.f32 %v1129, %v1147
        %v1150 = vadd.f32 %v1130, %v1148
        %v1151 = vlaneseq
        %v1152 = vshrl.u32 %v1151, 7
        %v1153 = vsub.s32 1, %v1152
        %v1154 = vrot.slane %v1137, %v1153
        %v1155 = vlaneseq
        %v1156 = vshrl.u32 %v1155, 7
        %v1157 = vsub.s32 1, %v1156
        %v1158 = vrot.slane %v1138, %v1157
        %v1159 = vmul.f32 %v518, %v1154
        %v1160 = vmul.f32 %v518, %v1158
        %v1161 = vadd.f32 %v1149, %v1159
        %v1162 = vadd.f32 %v1150, %v1160
        %v1163 = vlaneseq
        %v1164 = vshrl.u32 %v1163, 7
        %v1165 = vsub.s32 2, %v1164
        %v1166 = vrot.slane %v1137, %v1165
        %v1167 = vlaneseq
        %v1168 = vshrl.u32 %v1167, 7
        %v1169 = vsub.s32 2, %v1168
        %v1170 = vrot.slane %v1138, %v1169
        %v1171 = vmul.f32 %v534, %v1166
        %v1172 = vmul.f32 %v534, %v1170
        %v1173 = vadd.f32 %v1161, %v1171
        %v1174 = vadd.f32 %v1162, %v1172
        %v1175 = vlaneseq
        %v1176 = vshrl.u32 %v1175, 7
        %v1177 = vsub.s32 3, %v1176
        %v1178 = vrot.slane %v1137, %v1177
        %v1179 = vlaneseq
        %v1180 = vshrl.u32 %v1179, 7
        %v1181 = vsub.s32 3, %v1180
        %v1182 = vrot.slane %v1138, %v1181
        %v1183 = vmul.f32 %v550, %v1178
        %v1184 = vmul.f32 %v550, %v1182
        %v1185 = vadd.f32 %v1173, %v1183
        %v1186 = vadd.f32 %v1174, %v1184
        %v1187 = vlaneseq
        %v1188 = vshrl.u32 %v1187, 7
        %v1189 = vsub.s32 0, %v1188
        %v1190 = vrot.slane %v961, %v1189
        %v1191 = vlaneseq
        %v1192 = vshrl.u32 %v1191, 7
        %v1193 = vsub.s32 0, %v1192
        %v1194 = vrot.slane %v962, %v1193
        %v1195 = vmul.f32 %v566, %v1190
        %v1196 = vmul.f32 %v566, %v1194
        %v1197 = vadd.f32 %v1185, %v1195
        %v1198 = vadd.f32 %v1186, %v1196
        %v1199 = vlaneseq
        %v1200 = vshrl.u32 %v1199, 7
        %v1201 = vsub.s32 1, %v1200
        %v1202 = vrot.slane %v961, %v1201
        %v1203 = vlaneseq
        %v1204 = vshrl.u32 %v1203, 7
        %v1205 = vsub.s32 1, %v1204
        %v1206 = vrot.slane %v962, %v1205
        %v1207 = vmul.f32 %v582, %v1202
        %v1208 = vmul.f32 %v582, %v1206
        %v1209 = vadd.f32 %v1197, %v1207
        %v1210 = vadd.f32 %v1198, %v1208
        %v1211 = vlaneseq
        %v1212 = vshrl.u32 %v1211, 7
        %v1213 = vsub.s32 2, %v1212
        %v1214 = vrot.slane %v961, %v1213
        %v1215 = vlaneseq
        %v1216 = vshrl.u32 %v1215, 7
        %v1217 = vsub.s32 2, %v1216
        %v1218 = vrot.slane %v962, %v1217
        %v1219 = vmul.f32 %v598, %v1214
        %v1220 = vmul.f32 %v598, %v1218
        %v1221 = vadd.f32 %v1209, %v1219
        %v1222 = vadd.f32 %v1210, %v1220
        %v1223 = vlaneseq
        %v1224 = vshrl.u32 %v1223, 7
        %v1225 = vsub.s32 3, %v1224
        %v1226 = vrot.slane %v961, %v1225
        %v1227 = vlaneseq
        %v1228 = vshrl.u32 %v1227, 7
        %v1229 = vsub.s32 3, %v1228
        %v1230 = vrot.slane %v962, %v1229
        %v1231 = vmul.f32 %v614, %v1226
        %v1232 = vmul.f32 %v614, %v1230
        %v1233 = vadd.f32 %v1221, %v1231
        %v1234 = vadd.f32 %v1222, %v1232
        %1235 = vrot.lane.b32.xlu0 %v961, 127
        %v1236 = vpop.permute.xlu0 %1235
        %1237 = vrot.lane.b32.xlu0 %v962, 127
        %v1238 = vpop.permute.xlu0 %1237
        %v1239 = vsel %vm632, %v1236, %v1238
        %v1240 = vsel %vm632, %v1238, %v1236
        %v1241 = vmul.f32 %v1239, %v638
        %v1242 = vmul.f32 %v1240, %v642
        %v1243 = vlaneseq
        %v1244 = vshrl.u32 %v1243, 7
        %v1245 = vsub.s32 0, %v1244
        %v1246 = vrot.slane %v1241, %v1245
        %v1247 = vlaneseq
        %v1248 = vshrl.u32 %v1247, 7
        %v1249 = vsub.s32 0, %v1248
        %v1250 = vrot.slane %v1242, %v1249
        %v1251 = vmul.f32 %v647, %v1246
        %v1252 = vmul.f32 %v647, %v1250
        %v1253 = vadd.f32 %v1233, %v1251
        %v1254 = vadd.f32 %v1234, %v1252
        %v1255 = vlaneseq
        %v1256 = vshrl.u32 %v1255, 7
        %v1257 = vsub.s32 1, %v1256
        %v1258 = vrot.slane %v1241, %v1257
        %v1259 = vlaneseq
        %v1260 = vshrl.u32 %v1259, 7
        %v1261 = vsub.s32 1, %v1260
        %v1262 = vrot.slane %v1242, %v1261
        %v1263 = vmul.f32 %v663, %v1258
        %v1264 = vmul.f32 %v663, %v1262
        %v1265 = vadd.f32 %v1253, %v1263
        %v1266 = vadd.f32 %v1254, %v1264
        %v1267 = vlaneseq
        %v1268 = vshrl.u32 %v1267, 7
        %v1269 = vsub.s32 2, %v1268
        %v1270 = vrot.slane %v1241, %v1269
        %v1271 = vlaneseq
        %v1272 = vshrl.u32 %v1271, 7
        %v1273 = vsub.s32 2, %v1272
        %v1274 = vrot.slane %v1242, %v1273
        %v1275 = vmul.f32 %v679, %v1270
        %v1276 = vmul.f32 %v679, %v1274
        %v1277 = vadd.f32 %v1265, %v1275
        %v1278 = vadd.f32 %v1266, %v1276
        %v1279 = vlaneseq
        %v1280 = vshrl.u32 %v1279, 7
        %v1281 = vsub.s32 3, %v1280
        %v1282 = vrot.slane %v1241, %v1281
        %v1283 = vlaneseq
        %v1284 = vshrl.u32 %v1283, 7
        %v1285 = vsub.s32 3, %v1284
        %v1286 = vrot.slane %v1242, %v1285
        %v1287 = vmul.f32 %v695, %v1282
        %v1288 = vmul.f32 %v695, %v1286
        %v1289 = vadd.f32 %v1277, %v1287
        %v1290 = vadd.f32 %v1278, %v1288
        %1291 = vrot.lane.b32.xlu0 %v961, 113
        %v1292 = vpop.permute.xlu0 %1291
        %1293 = vrot.lane.b32.xlu0 %v962, 113
        %v1294 = vpop.permute.xlu0 %1293
        %v1295 = vsel %vm713, %v1292, %v1294
        %v1296 = vsel %vm713, %v1294, %v1292
        %v1297 = vmul.f32 %v1295, %v719
        %v1298 = vmul.f32 %v1296, %v723
        %v1299 = vlaneseq
        %v1300 = vshrl.u32 %v1299, 7
        %v1301 = vsub.s32 0, %v1300
        %v1302 = vrot.slane %v1297, %v1301
        %v1303 = vlaneseq
        %v1304 = vshrl.u32 %v1303, 7
        %v1305 = vsub.s32 0, %v1304
        %v1306 = vrot.slane %v1298, %v1305
        %v1307 = vmul.f32 %v728, %v1302
        %v1308 = vmul.f32 %v728, %v1306
        %v1309 = vadd.f32 %v1289, %v1307
        %v1310 = vadd.f32 %v1290, %v1308
        %v1311 = vlaneseq
        %v1312 = vshrl.u32 %v1311, 7
        %v1313 = vsub.s32 1, %v1312
        %v1314 = vrot.slane %v1297, %v1313
        %v1315 = vlaneseq
        %v1316 = vshrl.u32 %v1315, 7
        %v1317 = vsub.s32 1, %v1316
        %v1318 = vrot.slane %v1298, %v1317
        %v1319 = vmul.f32 %v744, %v1314
        %v1320 = vmul.f32 %v744, %v1318
        %v1321 = vadd.f32 %v1309, %v1319
        %v1322 = vadd.f32 %v1310, %v1320
        %v1323 = vlaneseq
        %v1324 = vshrl.u32 %v1323, 7
        %v1325 = vsub.s32 2, %v1324
        %v1326 = vrot.slane %v1297, %v1325
        %v1327 = vlaneseq
        %v1328 = vshrl.u32 %v1327, 7
        %v1329 = vsub.s32 2, %v1328
        %v1330 = vrot.slane %v1298, %v1329
        %v1331 = vmul.f32 %v760, %v1326
        %v1332 = vmul.f32 %v760, %v1330
        %v1333 = vadd.f32 %v1321, %v1331
        %v1334 = vadd.f32 %v1322, %v1332
        %v1335 = vlaneseq
        %v1336 = vshrl.u32 %v1335, 7
        %v1337 = vsub.s32 3, %v1336
        %v1338 = vrot.slane %v1297, %v1337
        %v1339 = vlaneseq
        %v1340 = vshrl.u32 %v1339, 7
        %v1341 = vsub.s32 3, %v1340
        %v1342 = vrot.slane %v1298, %v1341
        %v1343 = vmul.f32 %v776, %v1338
        %v1344 = vmul.f32 %v776, %v1342
        %v1345 = vadd.f32 %v1333, %v1343
        %v1346 = vadd.f32 %v1334, %v1344
        %1347 = vrot.lane.b32.xlu0 %v961, 112
        %v1348 = vpop.permute.xlu0 %1347
        %1349 = vrot.lane.b32.xlu0 %v962, 112
        %v1350 = vpop.permute.xlu0 %1349
        %v1351 = vsel %vm794, %v1348, %v1350
        %v1352 = vsel %vm794, %v1350, %v1348
        %v1353 = vmul.f32 %v1351, %v800
        %v1354 = vmul.f32 %v1352, %v804
        %v1355 = vlaneseq
        %v1356 = vshrl.u32 %v1355, 7
        %v1357 = vsub.s32 0, %v1356
        %v1358 = vrot.slane %v1353, %v1357
        %v1359 = vlaneseq
        %v1360 = vshrl.u32 %v1359, 7
        %v1361 = vsub.s32 0, %v1360
        %v1362 = vrot.slane %v1354, %v1361
        %v1363 = vmul.f32 %v809, %v1358
        %v1364 = vmul.f32 %v809, %v1362
        %v1365 = vadd.f32 %v1345, %v1363
        %v1366 = vadd.f32 %v1346, %v1364
        %v1367 = vlaneseq
        %v1368 = vshrl.u32 %v1367, 7
        %v1369 = vsub.s32 1, %v1368
        %v1370 = vrot.slane %v1353, %v1369
        %v1371 = vlaneseq
        %v1372 = vshrl.u32 %v1371, 7
        %v1373 = vsub.s32 1, %v1372
        %v1374 = vrot.slane %v1354, %v1373
        %v1375 = vmul.f32 %v825, %v1370
        %v1376 = vmul.f32 %v825, %v1374
        %v1377 = vadd.f32 %v1365, %v1375
        %v1378 = vadd.f32 %v1366, %v1376
        %v1379 = vlaneseq
        %v1380 = vshrl.u32 %v1379, 7
        %v1381 = vsub.s32 2, %v1380
        %v1382 = vrot.slane %v1353, %v1381
        %v1383 = vlaneseq
        %v1384 = vshrl.u32 %v1383, 7
        %v1385 = vsub.s32 2, %v1384
        %v1386 = vrot.slane %v1354, %v1385
        %v1387 = vmul.f32 %v841, %v1382
        %v1388 = vmul.f32 %v841, %v1386
        %v1389 = vadd.f32 %v1377, %v1387
        %v1390 = vadd.f32 %v1378, %v1388
        %v1391 = vlaneseq
        %v1392 = vshrl.u32 %v1391, 7
        %v1393 = vsub.s32 3, %v1392
        %v1394 = vrot.slane %v1353, %v1393
        %v1395 = vlaneseq
        %v1396 = vshrl.u32 %v1395, 7
        %v1397 = vsub.s32 3, %v1396
        %v1398 = vrot.slane %v1354, %v1397
        %v1399 = vmul.f32 %v857, %v1394
        %v1400 = vmul.f32 %v857, %v1398
        %v1401 = vadd.f32 %v1389, %v1399
        %v1402 = vadd.f32 %v1390, %v1400
        %1403 = vrot.lane.b32.xlu0 %v961, 111
        %v1404 = vpop.permute.xlu0 %1403
        %1405 = vrot.lane.b32.xlu0 %v962, 111
        %v1406 = vpop.permute.xlu0 %1405
        %v1407 = vsel %vm875, %v1404, %v1406
        %v1408 = vsel %vm875, %v1406, %v1404
        %v1409 = vmul.f32 %v1407, %v881
        %v1410 = vmul.f32 %v1408, %v885
        %v1411 = vlaneseq
        %v1412 = vshrl.u32 %v1411, 7
        %v1413 = vsub.s32 0, %v1412
        %v1414 = vrot.slane %v1409, %v1413
        %v1415 = vlaneseq
        %v1416 = vshrl.u32 %v1415, 7
        %v1417 = vsub.s32 0, %v1416
        %v1418 = vrot.slane %v1410, %v1417
        %v1419 = vmul.f32 %v890, %v1414
        %v1420 = vmul.f32 %v890, %v1418
        %v1421 = vadd.f32 %v1401, %v1419
        %v1422 = vadd.f32 %v1402, %v1420
        %v1423 = vlaneseq
        %v1424 = vshrl.u32 %v1423, 7
        %v1425 = vsub.s32 1, %v1424
        %v1426 = vrot.slane %v1409, %v1425
        %v1427 = vlaneseq
        %v1428 = vshrl.u32 %v1427, 7
        %v1429 = vsub.s32 1, %v1428
        %v1430 = vrot.slane %v1410, %v1429
        %v1431 = vmul.f32 %v906, %v1426
        %v1432 = vmul.f32 %v906, %v1430
        %v1433 = vadd.f32 %v1421, %v1431
        %v1434 = vadd.f32 %v1422, %v1432
        %v1435 = vlaneseq
        %v1436 = vshrl.u32 %v1435, 7
        %v1437 = vsub.s32 2, %v1436
        %v1438 = vrot.slane %v1409, %v1437
        %v1439 = vlaneseq
        %v1440 = vshrl.u32 %v1439, 7
        %v1441 = vsub.s32 2, %v1440
        %v1442 = vrot.slane %v1410, %v1441
        %v1443 = vmul.f32 %v922, %v1438
        %v1444 = vmul.f32 %v922, %v1442
        %v1445 = vadd.f32 %v1433, %v1443
        %v1446 = vadd.f32 %v1434, %v1444
        %v1447 = vlaneseq
        %v1448 = vshrl.u32 %v1447, 7
        %v1449 = vsub.s32 3, %v1448
        %v1450 = vrot.slane %v1409, %v1449
        %v1451 = vlaneseq
        %v1452 = vshrl.u32 %v1451, 7
        %v1453 = vsub.s32 3, %v1452
        %v1454 = vrot.slane %v1410, %v1453
        %v1455 = vmul.f32 %v938, %v1450
        %v1456 = vmul.f32 %v938, %v1454
        %v1457 = vadd.f32 %v1445, %v1455
        %v1458 = vadd.f32 %v1446, %v1456
        %v1459 = vadd.f32 %v1457, %v955
        %v1460 = vadd.f32 %v1458, %v955
        %v1461 = vmax.f32 %v1459, 0.0
        %v1462 = vmax.f32 %v1460, 0.0
        %v1463 = vadd.f32 %v229, %v1461
        %v1464 = vadd.f32 %v230, %v1462
        %1465 = vrot.lane.b32.xlu0 %v1463, 17
        %v1466 = vpop.permute.xlu0 %1465
        %1467 = vrot.lane.b32.xlu0 %v1464, 17
        %v1468 = vpop.permute.xlu0 %1467
        %v1469 = vsel %vm243, %v1466, %v1468
        %v1470 = vsel %vm243, %v1468, %v1466
        %v1471 = vmul.f32 %v1470, %v249
        %v1472 = vmul.f32 %v1469, %v253
        %v1473 = vlaneseq
        %v1474 = vshrl.u32 %v1473, 7
        %v1475 = vsub.s32 0, %v1474
        %v1476 = vrot.slane %v1471, %v1475
        %v1477 = vlaneseq
        %v1478 = vshrl.u32 %v1477, 7
        %v1479 = vsub.s32 0, %v1478
        %v1480 = vrot.slane %v1472, %v1479
        %v1481 = vmul.f32 %v259, %v1476
        %v1482 = vmul.f32 %v259, %v1480
        %v1483 = vadd.f32 %v1481, 0.0
        %v1484 = vadd.f32 %v1482, 0.0
        %v1485 = vlaneseq
        %v1486 = vshrl.u32 %v1485, 7
        %v1487 = vsub.s32 1, %v1486
        %v1488 = vrot.slane %v1471, %v1487
        %v1489 = vlaneseq
        %v1490 = vshrl.u32 %v1489, 7
        %v1491 = vsub.s32 1, %v1490
        %v1492 = vrot.slane %v1472, %v1491
        %v1493 = vmul.f32 %v275, %v1488
        %v1494 = vmul.f32 %v275, %v1492
        %v1495 = vadd.f32 %v1483, %v1493
        %v1496 = vadd.f32 %v1484, %v1494
        %v1497 = vlaneseq
        %v1498 = vshrl.u32 %v1497, 7
        %v1499 = vsub.s32 2, %v1498
        %v1500 = vrot.slane %v1471, %v1499
        %v1501 = vlaneseq
        %v1502 = vshrl.u32 %v1501, 7
        %v1503 = vsub.s32 2, %v1502
        %v1504 = vrot.slane %v1472, %v1503
        %v1505 = vmul.f32 %v291, %v1500
        %v1506 = vmul.f32 %v291, %v1504
        %v1507 = vadd.f32 %v1495, %v1505
        %v1508 = vadd.f32 %v1496, %v1506
        %v1509 = vlaneseq
        %v1510 = vshrl.u32 %v1509, 7
        %v1511 = vsub.s32 3, %v1510
        %v1512 = vrot.slane %v1471, %v1511
        %v1513 = vlaneseq
        %v1514 = vshrl.u32 %v1513, 7
        %v1515 = vsub.s32 3, %v1514
        %v1516 = vrot.slane %v1472, %v1515
        %v1517 = vmul.f32 %v307, %v1512
        %v1518 = vmul.f32 %v307, %v1516
        %v1519 = vadd.f32 %v1507, %v1517
        %v1520 = vadd.f32 %v1508, %v1518
        %1521 = vrot.lane.b32.xlu0 %v1463, 16
        %v1522 = vpop.permute.xlu0 %1521
        %1523 = vrot.lane.b32.xlu0 %v1464, 16
        %v1524 = vpop.permute.xlu0 %1523
        %v1525 = vsel %vm325, %v1522, %v1524
        %v1526 = vsel %vm325, %v1524, %v1522
        %v1527 = vmul.f32 %v1526, %v331
        %v1528 = vmul.f32 %v1525, %v335
        %v1529 = vlaneseq
        %v1530 = vshrl.u32 %v1529, 7
        %v1531 = vsub.s32 0, %v1530
        %v1532 = vrot.slane %v1527, %v1531
        %v1533 = vlaneseq
        %v1534 = vshrl.u32 %v1533, 7
        %v1535 = vsub.s32 0, %v1534
        %v1536 = vrot.slane %v1528, %v1535
        %v1537 = vmul.f32 %v340, %v1532
        %v1538 = vmul.f32 %v340, %v1536
        %v1539 = vadd.f32 %v1519, %v1537
        %v1540 = vadd.f32 %v1520, %v1538
        %v1541 = vlaneseq
        %v1542 = vshrl.u32 %v1541, 7
        %v1543 = vsub.s32 1, %v1542
        %v1544 = vrot.slane %v1527, %v1543
        %v1545 = vlaneseq
        %v1546 = vshrl.u32 %v1545, 7
        %v1547 = vsub.s32 1, %v1546
        %v1548 = vrot.slane %v1528, %v1547
        %v1549 = vmul.f32 %v356, %v1544
        %v1550 = vmul.f32 %v356, %v1548
        %v1551 = vadd.f32 %v1539, %v1549
        %v1552 = vadd.f32 %v1540, %v1550
        %v1553 = vlaneseq
        %v1554 = vshrl.u32 %v1553, 7
        %v1555 = vsub.s32 2, %v1554
        %v1556 = vrot.slane %v1527, %v1555
        %v1557 = vlaneseq
        %v1558 = vshrl.u32 %v1557, 7
        %v1559 = vsub.s32 2, %v1558
        %v1560 = vrot.slane %v1528, %v1559
        %v1561 = vmul.f32 %v372, %v1556
        %v1562 = vmul.f32 %v372, %v1560
        %v1563 = vadd.f32 %v1551, %v1561
        %v1564 = vadd.f32 %v1552, %v1562
        %v1565 = vlaneseq
        %v1566 = vshrl.u32 %v1565, 7
        %v1567 = vsub.s32 3, %v1566
        %v1568 = vrot.slane %v1527, %v1567
        %v1569 = vlaneseq
        %v1570 = vshrl.u32 %v1569, 7
        %v1571 = vsub.s32 3, %v1570
        %v1572 = vrot.slane %v1528, %v1571
        %v1573 = vmul.f32 %v388, %v1568
        %v1574 = vmul.f32 %v388, %v1572
        %v1575 = vadd.f32 %v1563, %v1573
        %v1576 = vadd.f32 %v1564, %v1574
        %1577 = vrot.lane.b32.xlu0 %v1463, 15
        %v1578 = vpop.permute.xlu0 %1577
        %1579 = vrot.lane.b32.xlu0 %v1464, 15
        %v1580 = vpop.permute.xlu0 %1579
        %v1581 = vsel %vm406, %v1578, %v1580
        %v1582 = vsel %vm406, %v1580, %v1578
        %v1583 = vmul.f32 %v1582, %v412
        %v1584 = vmul.f32 %v1581, %v416
        %v1585 = vlaneseq
        %v1586 = vshrl.u32 %v1585, 7
        %v1587 = vsub.s32 0, %v1586
        %v1588 = vrot.slane %v1583, %v1587
        %v1589 = vlaneseq
        %v1590 = vshrl.u32 %v1589, 7
        %v1591 = vsub.s32 0, %v1590
        %v1592 = vrot.slane %v1584, %v1591
        %v1593 = vmul.f32 %v421, %v1588
        %v1594 = vmul.f32 %v421, %v1592
        %v1595 = vadd.f32 %v1575, %v1593
        %v1596 = vadd.f32 %v1576, %v1594
        %v1597 = vlaneseq
        %v1598 = vshrl.u32 %v1597, 7
        %v1599 = vsub.s32 1, %v1598
        %v1600 = vrot.slane %v1583, %v1599
        %v1601 = vlaneseq
        %v1602 = vshrl.u32 %v1601, 7
        %v1603 = vsub.s32 1, %v1602
        %v1604 = vrot.slane %v1584, %v1603
        %v1605 = vmul.f32 %v437, %v1600
        %v1606 = vmul.f32 %v437, %v1604
        %v1607 = vadd.f32 %v1595, %v1605
        %v1608 = vadd.f32 %v1596, %v1606
        %v1609 = vlaneseq
        %v1610 = vshrl.u32 %v1609, 7
        %v1611 = vsub.s32 2, %v1610
        %v1612 = vrot.slane %v1583, %v1611
        %v1613 = vlaneseq
        %v1614 = vshrl.u32 %v1613, 7
        %v1615 = vsub.s32 2, %v1614
        %v1616 = vrot.slane %v1584, %v1615
        %v1617 = vmul.f32 %v453, %v1612
        %v1618 = vmul.f32 %v453, %v1616
        %v1619 = vadd.f32 %v1607, %v1617
        %v1620 = vadd.f32 %v1608, %v1618
        %v1621 = vlaneseq
        %v1622 = vshrl.u32 %v1621, 7
        %v1623 = vsub.s32 3, %v1622
        %v1624 = vrot.slane %v1583, %v1623
        %v1625 = vlaneseq
        %v1626 = vshrl.u32 %v1625, 7
        %v1627 = vsub.s32 3, %v1626
        %v1628 = vrot.slane %v1584, %v1627
        %v1629 = vmul.f32 %v469, %v1624
        %v1630 = vmul.f32 %v469, %v1628
        %v1631 = vadd.f32 %v1619, %v1629
        %v1632 = vadd.f32 %v1620, %v1630
        %1633 = vrot.lane.b32.xlu0 %v1463, 1
        %v1634 = vpop.permute.xlu0 %1633
        %1635 = vrot.lane.b32.xlu0 %v1464, 1
        %v1636 = vpop.permute.xlu0 %1635
        %v1637 = vsel %vm487, %v1634, %v1636
        %v1638 = vsel %vm487, %v1636, %v1634
        %v1639 = vmul.f32 %v1638, %v493
        %v1640 = vmul.f32 %v1637, %v497
        %v1641 = vlaneseq
        %v1642 = vshrl.u32 %v1641, 7
        %v1643 = vsub.s32 0, %v1642
        %v1644 = vrot.slane %v1639, %v1643
        %v1645 = vlaneseq
        %v1646 = vshrl.u32 %v1645, 7
        %v1647 = vsub.s32 0, %v1646
        %v1648 = vrot.slane %v1640, %v1647
        %v1649 = vmul.f32 %v502, %v1644
        %v1650 = vmul.f32 %v502, %v1648
        %v1651 = vadd.f32 %v1631, %v1649
        %v1652 = vadd.f32 %v1632, %v1650
        %v1653 = vlaneseq
        %v1654 = vshrl.u32 %v1653, 7
        %v1655 = vsub.s32 1, %v1654
        %v1656 = vrot.slane %v1639, %v1655
        %v1657 = vlaneseq
        %v1658 = vshrl.u32 %v1657, 7
        %v1659 = vsub.s32 1, %v1658
        %v1660 = vrot.slane %v1640, %v1659
        %v1661 = vmul.f32 %v518, %v1656
        %v1662 = vmul.f32 %v518, %v1660
        %v1663 = vadd.f32 %v1651, %v1661
        %v1664 = vadd.f32 %v1652, %v1662
        %v1665 = vlaneseq
        %v1666 = vshrl.u32 %v1665, 7
        %v1667 = vsub.s32 2, %v1666
        %v1668 = vrot.slane %v1639, %v1667
        %v1669 = vlaneseq
        %v1670 = vshrl.u32 %v1669, 7
        %v1671 = vsub.s32 2, %v1670
        %v1672 = vrot.slane %v1640, %v1671
        %v1673 = vmul.f32 %v534, %v1668
        %v1674 = vmul.f32 %v534, %v1672
        %v1675 = vadd.f32 %v1663, %v1673
        %v1676 = vadd.f32 %v1664, %v1674
        %v1677 = vlaneseq
        %v1678 = vshrl.u32 %v1677, 7
        %v1679 = vsub.s32 3, %v1678
        %v1680 = vrot.slane %v1639, %v1679
        %v1681 = vlaneseq
        %v1682 = vshrl.u32 %v1681, 7
        %v1683 = vsub.s32 3, %v1682
        %v1684 = vrot.slane %v1640, %v1683
        %v1685 = vmul.f32 %v550, %v1680
        %v1686 = vmul.f32 %v550, %v1684
        %v1687 = vadd.f32 %v1675, %v1685
        %v1688 = vadd.f32 %v1676, %v1686
        %v1689 = vlaneseq
        %v1690 = vshrl.u32 %v1689, 7
        %v1691 = vsub.s32 0, %v1690
        %v1692 = vrot.slane %v1463, %v1691
        %v1693 = vlaneseq
        %v1694 = vshrl.u32 %v1693, 7
        %v1695 = vsub.s32 0, %v1694
        %v1696 = vrot.slane %v1464, %v1695
        %v1697 = vmul.f32 %v566, %v1692
        %v1698 = vmul.f32 %v566, %v1696
        %v1699 = vadd.f32 %v1687, %v1697
        %v1700 = vadd.f32 %v1688, %v1698
        %v1701 = vlaneseq
        %v1702 = vshrl.u32 %v1701, 7
        %v1703 = vsub.s32 1, %v1702
        %v1704 = vrot.slane %v1463, %v1703
        %v1705 = vlaneseq
        %v1706 = vshrl.u32 %v1705, 7
        %v1707 = vsub.s32 1, %v1706
        %v1708 = vrot.slane %v1464, %v1707
        %v1709 = vmul.f32 %v582, %v1704
        %v1710 = vmul.f32 %v582, %v1708
        %v1711 = vadd.f32 %v1699, %v1709
        %v1712 = vadd.f32 %v1700, %v1710
        %v1713 = vlaneseq
        %v1714 = vshrl.u32 %v1713, 7
        %v1715 = vsub.s32 2, %v1714
        %v1716 = vrot.slane %v1463, %v1715
        %v1717 = vlaneseq
        %v1718 = vshrl.u32 %v1717, 7
        %v1719 = vsub.s32 2, %v1718
        %v1720 = vrot.slane %v1464, %v1719
        %v1721 = vmul.f32 %v598, %v1716
        %v1722 = vmul.f32 %v598, %v1720
        %v1723 = vadd.f32 %v1711, %v1721
        %v1724 = vadd.f32 %v1712, %v1722
        %v1725 = vlaneseq
        %v1726 = vshrl.u32 %v1725, 7
        %v1727 = vsub.s32 3, %v1726
        %v1728 = vrot.slane %v1463, %v1727
        %v1729 = vlaneseq
        %v1730 = vshrl.u32 %v1729, 7
        %v1731 = vsub.s32 3, %v1730
        %v1732 = vrot.slane %v1464, %v1731
        %v1733 = vmul.f32 %v614, %v1728
        %v1734 = vmul.f32 %v614, %v1732
        %v1735 = vadd.f32 %v1723, %v1733
        %v1736 = vadd.f32 %v1724, %v1734
        %1737 = vrot.lane.b32.xlu0 %v1463, 127
        %v1738 = vpop.permute.xlu0 %1737
        %1739 = vrot.lane.b32.xlu0 %v1464, 127
        %v1740 = vpop.permute.xlu0 %1739
        %v1741 = vsel %vm632, %v1738, %v1740
        %v1742 = vsel %vm632, %v1740, %v1738
        %v1743 = vmul.f32 %v1741, %v638
        %v1744 = vmul.f32 %v1742, %v642
        %v1745 = vlaneseq
        %v1746 = vshrl.u32 %v1745, 7
        %v1747 = vsub.s32 0, %v1746
        %v1748 = vrot.slane %v1743, %v1747
        %v1749 = vlaneseq
        %v1750 = vshrl.u32 %v1749, 7
        %v1751 = vsub.s32 0, %v1750
        %v1752 = vrot.slane %v1744, %v1751
        %v1753 = vmul.f32 %v647, %v1748
        %v1754 = vmul.f32 %v647, %v1752
        %v1755 = vadd.f32 %v1735, %v1753
        %v1756 = vadd.f32 %v1736, %v1754
        %v1757 = vlaneseq
        %v1758 = vshrl.u32 %v1757, 7
        %v1759 = vsub.s32 1, %v1758
        %v1760 = vrot.slane %v1743, %v1759
        %v1761 = vlaneseq
        %v1762 = vshrl.u32 %v1761, 7
        %v1763 = vsub.s32 1, %v1762
        %v1764 = vrot.slane %v1744, %v1763
        %v1765 = vmul.f32 %v663, %v1760
        %v1766 = vmul.f32 %v663, %v1764
        %v1767 = vadd.f32 %v1755, %v1765
        %v1768 = vadd.f32 %v1756, %v1766
        %v1769 = vlaneseq
        %v1770 = vshrl.u32 %v1769, 7
        %v1771 = vsub.s32 2, %v1770
        %v1772 = vrot.slane %v1743, %v1771
        %v1773 = vlaneseq
        %v1774 = vshrl.u32 %v1773, 7
        %v1775 = vsub.s32 2, %v1774
        %v1776 = vrot.slane %v1744, %v1775
        %v1777 = vmul.f32 %v679, %v1772
        %v1778 = vmul.f32 %v679, %v1776
        %v1779 = vadd.f32 %v1767, %v1777
        %v1780 = vadd.f32 %v1768, %v1778
        %v1781 = vlaneseq
        %v1782 = vshrl.u32 %v1781, 7
        %v1783 = vsub.s32 3, %v1782
        %v1784 = vrot.slane %v1743, %v1783
        %v1785 = vlaneseq
        %v1786 = vshrl.u32 %v1785, 7
        %v1787 = vsub.s32 3, %v1786
        %v1788 = vrot.slane %v1744, %v1787
        %v1789 = vmul.f32 %v695, %v1784
        %v1790 = vmul.f32 %v695, %v1788
        %v1791 = vadd.f32 %v1779, %v1789
        %v1792 = vadd.f32 %v1780, %v1790
        %1793 = vrot.lane.b32.xlu0 %v1463, 113
        %v1794 = vpop.permute.xlu0 %1793
        %1795 = vrot.lane.b32.xlu0 %v1464, 113
        %v1796 = vpop.permute.xlu0 %1795
        %v1797 = vsel %vm713, %v1794, %v1796
        %v1798 = vsel %vm713, %v1796, %v1794
        %v1799 = vmul.f32 %v1797, %v719
        %v1800 = vmul.f32 %v1798, %v723
        %v1801 = vlaneseq
        %v1802 = vshrl.u32 %v1801, 7
        %v1803 = vsub.s32 0, %v1802
        %v1804 = vrot.slane %v1799, %v1803
        %v1805 = vlaneseq
        %v1806 = vshrl.u32 %v1805, 7
        %v1807 = vsub.s32 0, %v1806
        %v1808 = vrot.slane %v1800, %v1807
        %v1809 = vmul.f32 %v728, %v1804
        %v1810 = vmul.f32 %v728, %v1808
        %v1811 = vadd.f32 %v1791, %v1809
        %v1812 = vadd.f32 %v1792, %v1810
        %v1813 = vlaneseq
        %v1814 = vshrl.u32 %v1813, 7
        %v1815 = vsub.s32 1, %v1814
        %v1816 = vrot.slane %v1799, %v1815
        %v1817 = vlaneseq
        %v1818 = vshrl.u32 %v1817, 7
        %v1819 = vsub.s32 1, %v1818
        %v1820 = vrot.slane %v1800, %v1819
        %v1821 = vmul.f32 %v744, %v1816
        %v1822 = vmul.f32 %v744, %v1820
        %v1823 = vadd.f32 %v1811, %v1821
        %v1824 = vadd.f32 %v1812, %v1822
        %v1825 = vlaneseq
        %v1826 = vshrl.u32 %v1825, 7
        %v1827 = vsub.s32 2, %v1826
        %v1828 = vrot.slane %v1799, %v1827
        %v1829 = vlaneseq
        %v1830 = vshrl.u32 %v1829, 7
        %v1831 = vsub.s32 2, %v1830
        %v1832 = vrot.slane %v1800, %v1831
        %v1833 = vmul.f32 %v760, %v1828
        %v1834 = vmul.f32 %v760, %v1832
        %v1835 = vadd.f32 %v1823, %v1833
        %v1836 = vadd.f32 %v1824, %v1834
        %v1837 = vlaneseq
        %v1838 = vshrl.u32 %v1837, 7
        %v1839 = vsub.s32 3, %v1838
        %v1840 = vrot.slane %v1799, %v1839
        %v1841 = vlaneseq
        %v1842 = vshrl.u32 %v1841, 7
        %v1843 = vsub.s32 3, %v1842
        %v1844 = vrot.slane %v1800, %v1843
        %v1845 = vmul.f32 %v776, %v1840
        %v1846 = vmul.f32 %v776, %v1844
        %v1847 = vadd.f32 %v1835, %v1845
        %v1848 = vadd.f32 %v1836, %v1846
        %1849 = vrot.lane.b32.xlu0 %v1463, 112
        %v1850 = vpop.permute.xlu0 %1849
        %1851 = vrot.lane.b32.xlu0 %v1464, 112
        %v1852 = vpop.permute.xlu0 %1851
        %v1853 = vsel %vm794, %v1850, %v1852
        %v1854 = vsel %vm794, %v1852, %v1850
        %v1855 = vmul.f32 %v1853, %v800
        %v1856 = vmul.f32 %v1854, %v804
        %v1857 = vlaneseq
        %v1858 = vshrl.u32 %v1857, 7
        %v1859 = vsub.s32 0, %v1858
        %v1860 = vrot.slane %v1855, %v1859
        %v1861 = vlaneseq
        %v1862 = vshrl.u32 %v1861, 7
        %v1863 = vsub.s32 0, %v1862
        %v1864 = vrot.slane %v1856, %v1863
        %v1865 = vmul.f32 %v809, %v1860
        %v1866 = vmul.f32 %v809, %v1864
        %v1867 = vadd.f32 %v1847, %v1865
        %v1868 = vadd.f32 %v1848, %v1866
        %v1869 = vlaneseq
        %v1870 = vshrl.u32 %v1869, 7
        %v1871 = vsub.s32 1, %v1870
        %v1872 = vrot.slane %v1855, %v1871
        %v1873 = vlaneseq
        %v1874 = vshrl.u32 %v1873, 7
        %v1875 = vsub.s32 1, %v1874
        %v1876 = vrot.slane %v1856, %v1875
        %v1877 = vmul.f32 %v825, %v1872
        %v1878 = vmul.f32 %v825, %v1876
        %v1879 = vadd.f32 %v1867, %v1877
        %v1880 = vadd.f32 %v1868, %v1878
        %v1881 = vlaneseq
        %v1882 = vshrl.u32 %v1881, 7
        %v1883 = vsub.s32 2, %v1882
        %v1884 = vrot.slane %v1855, %v1883
        %v1885 = vlaneseq
        %v1886 = vshrl.u32 %v1885, 7
        %v1887 = vsub.s32 2, %v1886
        %v1888 = vrot.slane %v1856, %v1887
        %v1889 = vmul.f32 %v841, %v1884
        %v1890 = vmul.f32 %v841, %v1888
        %v1891 = vadd.f32 %v1879, %v1889
        %v1892 = vadd.f32 %v1880, %v1890
        %v1893 = vlaneseq
        %v1894 = vshrl.u32 %v1893, 7
        %v1895 = vsub.s32 3, %v1894
        %v1896 = vrot.slane %v1855, %v1895
        %v1897 = vlaneseq
        %v1898 = vshrl.u32 %v1897, 7
        %v1899 = vsub.s32 3, %v1898
        %v1900 = vrot.slane %v1856, %v1899
        %v1901 = vmul.f32 %v857, %v1896
        %v1902 = vmul.f32 %v857, %v1900
        %v1903 = vadd.f32 %v1891, %v1901
        %v1904 = vadd.f32 %v1892, %v1902
        %1905 = vrot.lane.b32.xlu0 %v1463, 111
        %v1906 = vpop.permute.xlu0 %1905
        %1907 = vrot.lane.b32.xlu0 %v1464, 111
        %v1908 = vpop.permute.xlu0 %1907
        %v1909 = vsel %vm875, %v1906, %v1908
        %v1910 = vsel %vm875, %v1908, %v1906
        %v1911 = vmul.f32 %v1909, %v881
        %v1912 = vmul.f32 %v1910, %v885
        %v1913 = vlaneseq
        %v1914 = vshrl.u32 %v1913, 7
        %v1915 = vsub.s32 0, %v1914
        %v1916 = vrot.slane %v1911, %v1915
        %v1917 = vlaneseq
        %v1918 = vshrl.u32 %v1917, 7
        %v1919 = vsub.s32 0, %v1918
        %v1920 = vrot.slane %v1912, %v1919
        %v1921 = vmul.f32 %v890, %v1916
        %v1922 = vmul.f32 %v890, %v1920
        %v1923 = vadd.f32 %v1903, %v1921
        %v1924 = vadd.f32 %v1904, %v1922
        %v1925 = vlaneseq
        %v1926 = vshrl.u32 %v1925, 7
        %v1927 = vsub.s32 1, %v1926
        %v1928 = vrot.slane %v1911, %v1927
        %v1929 = vlaneseq
        %v1930 = vshrl.u32 %v1929, 7
        %v1931 = vsub.s32 1, %v1930
        %v1932 = vrot.slane %v1912, %v1931
        %v1933 = vmul.f32 %v906, %v1928
        %v1934 = vmul.f32 %v906, %v1932
        %v1935 = vadd.f32 %v1923, %v1933
        %v1936 = vadd.f32 %v1924, %v1934
        %v1937 = vlaneseq
        %v1938 = vshrl.u32 %v1937, 7
        %v1939 = vsub.s32 2, %v1938
        %v1940 = vrot.slane %v1911, %v1939
        %v1941 = vlaneseq
        %v1942 = vshrl.u32 %v1941, 7
        %v1943 = vsub.s32 2, %v1942
        %v1944 = vrot.slane %v1912, %v1943
        %v1945 = vmul.f32 %v922, %v1940
        %v1946 = vmul.f32 %v922, %v1944
        %v1947 = vadd.f32 %v1935, %v1945
        %v1948 = vadd.f32 %v1936, %v1946
        %v1949 = vlaneseq
        %v1950 = vshrl.u32 %v1949, 7
        %v1951 = vsub.s32 3, %v1950
        %v1952 = vrot.slane %v1911, %v1951
        %v1953 = vlaneseq
        %v1954 = vshrl.u32 %v1953, 7
        %v1955 = vsub.s32 3, %v1954
        %v1956 = vrot.slane %v1912, %v1955
        %v1957 = vmul.f32 %v938, %v1952
        %v1958 = vmul.f32 %v938, %v1956
        %v1959 = vadd.f32 %v1947, %v1957
        %v1960 = vadd.f32 %v1948, %v1958
        %v1961 = vadd.f32 %v1959, %v955
        %v1962 = vadd.f32 %v1960, %v955
        %v1963 = vmax.f32 %v1961, 0.0
        %v1964 = vmax.f32 %v1962, 0.0
        %1965 = vst [vmem:[%s228] sm:$0xff] %v1963
        %1966 = vst [vmem:[%s228 + $0x8] sm:$0xff] %v1964
        %s1967 = sand.u32 %s119, 1
        %s1968 = scalar_lea.sflag [#allocation4], %s1967
        %s1969 = sand.u32 %s119, 1
        %s1970 = smul.addr %s1969, 16
        %s1971 = scalar_lea.vmem [#allocation7], %s1970
        // Predicated region
        $region45: #{tpu_custom_call.1} parent=35 // pred_check
          %p1972 = pneg %p129
        $region46: #{tpu_custom_call.1} parent=35 // pred_check_branch
          %1974 = sbr.rel (%p1972) target = $region48
        $region47: #{tpu_custom_call.1} parent=35 // pred_region
          %s1976 = ssub.s32 256, 256
          %1977 = vsyncadd %s1968, %s1976
          %s1978 = smul.addr %s22, 2
          %s1979 = smul.addr %s1978, 128
          %s1980 = scalar_lea.hbm %s4, %s1979
          %s1982 = sshll.u32 %s1971, 4
          %s1983 = int_to_ptr.vmem [resolvable:$true] %s1982
          %1985 = dma.vmem_to_hbm [thread:$0]  %s1983, 256, %s1980, %s1968
        $region48: #{tpu_custom_call.1} parent=35 // pred_fallthru
          _
      $region36: #{tpu_custom_call.1} parent=5 // pred_fallthru
        _
      %p1986 = scmp.le.s32.totalorder 2, %s17
      // Predicated region
      $region49: #{tpu_custom_call.1} parent=5 // pred_check
        %p1987 = pneg %p1986
      $region50: #{tpu_custom_call.1} parent=5 // pred_check_branch
        %1989 = sbr.rel (%p1987) target = $region52
      $region51: #{tpu_custom_call.1} parent=5 // pred_region
        %s1990 = ssub.s32 %s17, 2
        // Predicated region
        $region53: #{tpu_custom_call.1} parent=51 // pred_check
          %p1991 = pneg %p135
        $region54: #{tpu_custom_call.1} parent=51 // pred_check_branch
          %1993 = sbr.rel (%p1991) target = $region56
        $region55: #{tpu_custom_call.1} parent=51 // pred_region
          %s1994 = sand.u32 %s120, 1
          %s1995 = scalar_lea.sflag [#allocation4], %s1994
          %s1996 = sand.u32 %s120, 1
          %s1997 = smul.addr %s1996, 16
          %s1998 = scalar_lea.vmem [#allocation7], %s1997
          %1999 = dma.done %s1995, 256
        $region56: #{tpu_custom_call.1} parent=51 // pred_fallthru
          _
      $region52: #{tpu_custom_call.1} parent=5 // pred_fallthru
        _
    $region6: #{tpu_custom_call.1} parent=1 // loop_footer
      %s21 = sadd.s32 1, %s17
    $region7: #{tpu_custom_call.1} parent=1 // loop_footer_branch
      %16 = sbr.rel target = $region3
    $region8: #{tpu_custom_call.1} parent=1 // loop_exit
      _
    %2000 = vsyncpa [#allocation3], 1
    %s2001 = scalar_lea.sflag [#allocation3], 1
    %2002 = vsyncpa %s2001, 1
    %2003 = vsyncpa [#allocation6], 1
    %2004 = vsyncpa [#allocation4], 1
    %s2005 = scalar_lea.sflag [#allocation4], 1
    %2006 = vsyncpa %s2005, 1

</llo_original>
